<compile_context>
chip_gen: v7x
topology: tpu7x:2x2x1
jax: 0.10.0
libtpu: 0.0.40
codegen_flags: <defaults>
</compile_context>

<pallas_src>
import functools

import numpy as np

import jax
import jax.numpy as jnp
from jax.experimental import pallas as pl
from jax.experimental.pallas import tpu as pltpu

KSIZE = 7


def _pick_tile(total, cap, align=8):
    """Largest divisor d of `total` with d <= cap and (d == total or d % align == 0).

    The "full dim or multiple of 8" rule keeps every block's second-minor dim
    legal for the TPU (8, 128) tiling.  Falls back to `total` if nothing fits.
    """
    cap = max(1, cap)
    best = None
    for d in range(1, total + 1):
        if total % d != 0 or d > cap:
            continue
        if d != total and d % align != 0:
            continue
        best = d
    return best if best is not None else total


def _spatial_attention_kernel(w_ref, mask_ref, x_ref, o_ref,
                              sum_ref, max_ref, avg_buf, max_buf,
                              *, H, W, K, C):
    # w_ref   : SMEM (2*K*K,) f32 conv weights, order [in_chan(avg,max), kh, kw]
    # mask_ref: VMEM (K, 1, H*W) f32 column-validity masks (one per kw offset)
    # x_ref   : VMEM (BT, CT, H*W) input block, spatial flattened into lanes
    # o_ref   : VMEM (BT, H*W) output block (lane-dense)
    # sum_ref / max_ref : VMEM (BT, H*W) f32 running channel sum / max
    # avg_buf / max_buf : VMEM (BT, H*W + 2*(P*W+P)) f32 zero-padded flat planes
    P = K // 2
    HW = H * W
    OFF = P * W + P                    # flat-index zero padding on each side

    c_idx = pl.program_id(1)
    n_c = pl.num_programs(1)

    x = x_ref[...].astype(jnp.float32)        # f32 accumulation (bf16-safe)
    part_sum = jnp.sum(x, axis=1)             # (BT, HW)
    part_max = jnp.max(x, axis=1)             # (BT, HW)

    @pl.when(c_idx == 0)
    def _init():
        sum_ref[...] = part_sum
        max_ref[...] = part_max

    @pl.when(c_idx != 0)
    def _accumulate():
        sum_ref[...] = sum_ref[...] + part_sum
        max_ref[...] = jnp.maximum(max_ref[...], part_max)

    @pl.when(c_idx == n_c - 1)
    def _conv_and_store():
        avg = sum_ref[...] * (1.0 / C)        # channel mean, f32
        mx = max_ref[...]

        # Pooled planes -> zero-padded flat buffers, so every conv tap below is
        # an in-bounds static slice and the buffer zeros realize the conv's
        # zero padding for out-of-range rows.
        avg_buf[...] = jnp.zeros_like(avg_buf)
        max_buf[...] = jnp.zeros_like(max_buf)
        avg_buf[:, pl.ds(OFF, HW)] = avg
        max_buf[:, pl.ds(OFF, HW)] = mx

        masks = mask_ref[...]                 # (K, 1, HW)
        acc = jnp.zeros_like(avg)
        for ci, buf in enumerate((avg_buf, max_buf)):      # avg chan, max chan
            for dj in range(-P, P + 1):                    # kw offset
                tap_sum = jnp.zeros_like(avg)
                for di in range(-P, P + 1):                # kh offset
                    w = w_ref[ci * K * K + (di + P) * K + (dj + P)]
                    start = OFF + di * W + dj
                    tap_sum = tap_sum + w * buf[:, pl.ds(start, HW)]
                # Zero the taps that crossed a row boundary for this kw offset.
                acc = acc + tap_sum * masks[dj + P]
        o_ref[...] = jax.nn.sigmoid(acc).astype(o_ref.dtype)


def spatial_attention(x, conv_weight):
    """x: (N, C, H, W); conv_weight: (1, 2, K, K) (Conv2d(2, 1, K), no bias).

    Returns (N, 1, H, W) sigmoid spatial-attention map == SpatialAttention.forward.
    """
    N, C, H, W = x.shape
    K = conv_weight.shape[-1]
    P = K // 2
    HW = H * W
    OFF = P * W + P

    # Free layout changes only (no HBM data movement): flatten spatial dims.
    x_flat = x.reshape(N, C, HW)
    w_flat = conv_weight.reshape(-1).astype(jnp.float32)       # (2*K*K,)

    # Column-validity masks: masks[dj+P, 0, k] == 1 iff 0 <= (k % W) + dj < W.
    col = np.arange(HW) % W
    masks = np.stack(
        [((col + dj >= 0) & (col + dj < W)).astype(np.float32)
         for dj in range(-P, P + 1)]).reshape(K, 1, HW)
    masks = jnp.asarray(masks)

    itemsize = jnp.dtype(x.dtype).itemsize
    budget = 4 * 1024 * 1024     # soft per-buffer VMEM budget (safe on v5e/v6e/v7x)

    # Batch tile (second-minor dim of the output block).
    bt_cap = min(8, max(1, budget // max(1, 32 * HW)))
    BT = _pick_tile(N, bt_cap)
    # Channel tile (second-minor dim of the input block); factor 2 ~ double buffer.
    ct_cap = max(1, budget // max(1, 2 * BT * HW * itemsize))
    CT = _pick_tile(C, ct_cap)

    kernel = functools.partial(_spatial_attention_kernel, H=H, W=W, K=K, C=C)

    out_flat = pl.pallas_call(
        kernel,
        out_shape=jax.ShapeDtypeStruct((N, HW), x.dtype),
        grid=(N // BT, C // CT),
        in_specs=[
            pl.BlockSpec(memory_space=pltpu.MemorySpace.SMEM),     # conv weights
            pl.BlockSpec((K, 1, HW), lambda n, c: (0, 0, 0)),      # column masks
            pl.BlockSpec((BT, CT, HW), lambda n, c: (n, c, 0)),    # input block
        ],
        out_specs=pl.BlockSpec((BT, HW), lambda n, c: (n, 0)),
        scratch_shapes=[
            pltpu.VMEM((BT, HW), jnp.float32),             # running channel sum
            pltpu.VMEM((BT, HW), jnp.float32),             # running channel max
            pltpu.VMEM((BT, HW + 2 * OFF), jnp.float32),   # padded avg plane
            pltpu.VMEM((BT, HW + 2 * OFF), jnp.float32),   # padded max plane
        ],
        compiler_params=pltpu.CompilerParams(
            dimension_semantics=("parallel", "arbitrary"),
            vmem_limit_bytes=32 * 1024 * 1024),
    )(w_flat, masks, x_flat)
    return out_flat.reshape(N, 1, H, W)


def spatial_attention_smart(x, conv_weight):
    """TemporallySharedBlock.smart_forward: collapse (b, t) for 5-D inputs."""
    if x.ndim == 5:
        b, t, c, h, w = x.shape
        out = spatial_attention(x.reshape(b * t, c, h, w), conv_weight)
        return out.reshape(b, t, 1, h, w)
    return spatial_attention(x, conv_weight)


def _reference(x, conv_weight):
    """Pure-JAX reference mirroring the PyTorch forward."""
    avg = jnp.mean(x, axis=1, keepdims=True)
    mx = jnp.max(x, axis=1, keepdims=True)
    cat = jnp.concatenate([avg, mx], axis=1)          # (N, 2, H, W)
    pad = conv_weight.shape[-1] // 2
    y = jax.lax.conv_general_dilated(
        cat, conv_weight,
        window_strides=(1, 1), padding=[(pad, pad), (pad, pad)],
        dimension_numbers=("NCHW", "OIHW", "NCHW"))
    return jax.nn.sigmoid(y)


if __name__ == "__main__":
    key = jax.random.PRNGKey(0)
    kx, kw = jax.random.split(key)

    N, C, H, W = 2, 4, 16, 16
    x = jax.random.normal(kx, (N, C, H, W), dtype=jnp.float32)

    # Deterministic Conv2d(2, 1, 7, bias=False) weight init (Kaiming-uniform-like).
    fan_in = 2 * KSIZE * KSIZE
    bound = 1.0 / float(np.sqrt(fan_in))
    conv_weight = jax.random.uniform(
        kw, (1, 2, KSIZE, KSIZE), dtype=jnp.float32, minval=-bound, maxval=bound)

    out = spatial_attention(x, conv_weight)
    out = jax.block_until_ready(out)

    ref = _reference(x, conv_weight)
    assert out.shape == (N, 1, H, W)
    err = float(jnp.max(jnp.abs(out - ref)))
    assert err < 1e-5, f"max err {err}"

    print("KERNEL_OK")
</pallas_src>

<mosaic_0001>
module attributes {stable_mosaic.version = 11 : i64} {
  func.func @_spatial_attention_kernel(%arg0: i32, %arg1: i32, %arg2: memref<98xf32, #tpu.memory_space<smem>>, %arg3: memref<7x1x256xf32, #tpu.memory_space<vmem>>, %arg4: memref<2x4x256xf32, #tpu.memory_space<vmem>>, %arg5: memref<2x256xf32, #tpu.memory_space<vmem>>, %arg6: memref<2x256xf32, #tpu.memory_space<vmem>>, %arg7: memref<2x256xf32, #tpu.memory_space<vmem>>, %arg8: memref<2x358xf32, #tpu.memory_space<vmem>>, %arg9: memref<2x358xf32, #tpu.memory_space<vmem>>) attributes {dimension_semantics = [#tpu.dimension_semantics<parallel>, #tpu.dimension_semantics<arbitrary>], iteration_bounds = array<i64: 1, 1>, scalar_prefetch = 0 : i64, scratch_operands = 4 : i64, tpu.core_type = #tpu.core_type<tc>, window_params = [{transform_indices = @transform_0, window_bounds = array<i64: 98>}, {pipeline_mode = #tpu.pipeline_mode<synchronous>, transform_indices = @transform_1, window_bounds = array<i64: 7, 1, 256>}, {transform_indices = @transform_2, window_bounds = array<i64: 2, 4, 256>}, {transform_indices = @transform_3, window_bounds = array<i64: 2, 256>}]} {
    %c0 = arith.constant 0 : index
    %c0_0 = arith.constant 0 : index
    %c0_1 = arith.constant 0 : index
    %0 = vector.load %arg4[%c0, %c0_0, %c0_1] : memref<2x4x256xf32, #tpu.memory_space<vmem>>, vector<2x4x256xf32>
    %cst = arith.constant dense<0.000000e+00> : vector<2x256xf32>
    %1 = vector.multi_reduction <add>, %0, %cst [1] : vector<2x4x256xf32> to vector<2x256xf32>
    %cst_2 = arith.constant dense<0xFF800000> : vector<2x256xf32>
    %2 = vector.multi_reduction <maximumf>, %0, %cst_2 [1] : vector<2x4x256xf32> to vector<2x256xf32>
    %c0_i32 = arith.constant 0 : i32
    %3 = arith.cmpi eq, %arg1, %c0_i32 : i32
    %4 = arith.extui %3 : i1 to i32
    %c0_i32_3 = arith.constant 0 : i32
    %5 = arith.cmpi ne, %4, %c0_i32_3 : i32
    scf.if %5 {
      %c0_8 = arith.constant 0 : index
      %c0_9 = arith.constant 0 : index
      %12 = vector.load %arg6[%c0_8, %c0_9] : memref<2x256xf32, #tpu.memory_space<vmem>>, vector<2x256xf32>
      tpu.vector_store %arg6[%c0_8, %c0_9], %1 {strides = array<i32>} : memref<2x256xf32, #tpu.memory_space<vmem>>, vector<2x256xf32>,
      %c0_10 = arith.constant 0 : index
      %c0_11 = arith.constant 0 : index
      %13 = vector.load %arg7[%c0_10, %c0_11] : memref<2x256xf32, #tpu.memory_space<vmem>>, vector<2x256xf32>
      tpu.vector_store %arg7[%c0_10, %c0_11], %2 {strides = array<i32>} : memref<2x256xf32, #tpu.memory_space<vmem>>, vector<2x256xf32>,
    } else {
    }
    %c0_i32_4 = arith.constant 0 : i32
    %6 = arith.cmpi ne, %arg1, %c0_i32_4 : i32
    %7 = arith.extui %6 : i1 to i32
    %c0_i32_5 = arith.constant 0 : i32
    %8 = arith.cmpi ne, %7, %c0_i32_5 : i32
    scf.if %8 {
      %c0_8 = arith.constant 0 : index
      %c0_9 = arith.constant 0 : index
      %12 = vector.load %arg6[%c0_8, %c0_9] : memref<2x256xf32, #tpu.memory_space<vmem>>, vector<2x256xf32>
      %13 = arith.addf %12, %1 : vector<2x256xf32>
      %c0_10 = arith.constant 0 : index
      %c0_11 = arith.constant 0 : index
      %14 = vector.load %arg6[%c0_10, %c0_11] : memref<2x256xf32, #tpu.memory_space<vmem>>, vector<2x256xf32>
      tpu.vector_store %arg6[%c0_10, %c0_11], %13 {strides = array<i32>} : memref<2x256xf32, #tpu.memory_space<vmem>>, vector<2x256xf32>,
      %c0_12 = arith.constant 0 : index
      %c0_13 = arith.constant 0 : index
      %15 = vector.load %arg7[%c0_12, %c0_13] : memref<2x256xf32, #tpu.memory_space<vmem>>, vector<2x256xf32>
      %16 = arith.maximumf %15, %2 : vector<2x256xf32>
      %c0_14 = arith.constant 0 : index
      %c0_15 = arith.constant 0 : index
      %17 = vector.load %arg7[%c0_14, %c0_15] : memref<2x256xf32, #tpu.memory_space<vmem>>, vector<2x256xf32>
      tpu.vector_store %arg7[%c0_14, %c0_15], %16 {strides = array<i32>} : memref<2x256xf32, #tpu.memory_space<vmem>>, vector<2x256xf32>,
    } else {
    }
    %c0_i32_6 = arith.constant 0 : i32
    %9 = arith.cmpi eq, %arg1, %c0_i32_6 : i32
    %10 = arith.extui %9 : i1 to i32
    %c0_i32_7 = arith.constant 0 : i32
    %11 = arith.cmpi ne, %10, %c0_i32_7 : i32
    scf.if %11 {
      %c0_8 = arith.constant 0 : index
      %c0_9 = arith.constant 0 : index
      %12 = vector.load %arg6[%c0_8, %c0_9] : memref<2x256xf32, #tpu.memory_space<vmem>>, vector<2x256xf32>
      %cst_10 = arith.constant 2.500000e-01 : f32
      %13 = vector.broadcast %cst_10 : f32 to vector<2x256xf32>
      %14 = arith.mulf %12, %13 : vector<2x256xf32>
      %c0_11 = arith.constant 0 : index
      %c0_12 = arith.constant 0 : index
      %15 = vector.load %arg7[%c0_11, %c0_12] : memref<2x256xf32, #tpu.memory_space<vmem>>, vector<2x256xf32>
      %cst_13 = arith.constant 0.000000e+00 : f32
      %16 = vector.broadcast %cst_13 : f32 to vector<2x358xf32>
      %c0_14 = arith.constant 0 : index
      %c0_15 = arith.constant 0 : index
      %17 = vector.load %arg8[%c0_14, %c0_15] : memref<2x358xf32, #tpu.memory_space<vmem>>, vector<2x358xf32>
      tpu.vector_store %arg8[%c0_14, %c0_15], %16 {strides = array<i32>} : memref<2x358xf32, #tpu.memory_space<vmem>>, vector<2x358xf32>,
      %cst_16 = arith.constant 0.000000e+00 : f32
      %18 = vector.broadcast %cst_16 : f32 to vector<2x358xf32>
      %c0_17 = arith.constant 0 : index
      %c0_18 = arith.constant 0 : index
      %19 = vector.load %arg9[%c0_17, %c0_18] : memref<2x358xf32, #tpu.memory_space<vmem>>, vector<2x358xf32>
      tpu.vector_store %arg9[%c0_17, %c0_18], %18 {strides = array<i32>} : memref<2x358xf32, #tpu.memory_space<vmem>>, vector<2x358xf32>,
      %c0_19 = arith.constant 0 : index
      %c51 = arith.constant 51 : index
      %20 = vector.load %arg8[%c0_19, %c51] : memref<2x358xf32, #tpu.memory_space<vmem>>, vector<2x256xf32>
      tpu.vector_store %arg8[%c0_19, %c51], %14 {strides = array<i32>} : memref<2x358xf32, #tpu.memory_space<vmem>>, vector<2x256xf32>,
      %c0_20 = arith.constant 0 : index
      %c51_21 = arith.constant 51 : index
      %21 = vector.load %arg9[%c0_20, %c51_21] : memref<2x358xf32, #tpu.memory_space<vmem>>, vector<2x256xf32>
      tpu.vector_store %arg9[%c0_20, %c51_21], %15 {strides = array<i32>} : memref<2x358xf32, #tpu.memory_space<vmem>>, vector<2x256xf32>,
      %c0_22 = arith.constant 0 : index
      %c0_23 = arith.constant 0 : index
      %c0_24 = arith.constant 0 : index
      %22 = vector.load %arg3[%c0_22, %c0_23, %c0_24] : memref<7x1x256xf32, #tpu.memory_space<vmem>>, vector<7x1x256xf32>
      %cst_25 = arith.constant 0.000000e+00 : f32
      %23 = vector.broadcast %cst_25 : f32 to vector<2x256xf32>
      %cst_26 = arith.constant 0.000000e+00 : f32
      %24 = vector.broadcast %cst_26 : f32 to vector<2x256xf32>
      %c0_27 = arith.constant 0 : index
      %25 = memref.load %arg2[%c0_27] : memref<98xf32, #tpu.memory_space<smem>>
      %c0_28 = arith.constant 0 : index
      %c0_29 = arith.constant 0 : index
      %26 = vector.load %arg8[%c0_28, %c0_29] : memref<2x358xf32, #tpu.memory_space<vmem>>, vector<2x256xf32>
      %27 = vector.broadcast %25 : f32 to vector<2x256xf32>
      %28 = arith.mulf %27, %26 : vector<2x256xf32>
      %29 = arith.addf %24, %28 : vector<2x256xf32>
      %c7 = arith.constant 7 : index
      %30 = memref.load %arg2[%c7] : memref<98xf32, #tpu.memory_space<smem>>
      %c0_30 = arith.constant 0 : index
      %c16 = arith.constant 16 : index
      %31 = vector.load %arg8[%c0_30, %c16] : memref<2x358xf32, #tpu.memory_space<vmem>>, vector<2x256xf32>
      %32 = vector.broadcast %30 : f32 to vector<2x256xf32>
      %33 = arith.mulf %32, %31 : vector<2x256xf32>
      %34 = arith.addf %29, %33 : vector<2x256xf32>
      %c14 = arith.constant 14 : index
      %35 = memref.load %arg2[%c14] : memref<98xf32, #tpu.memory_space<smem>>
      %c0_31 = arith.constant 0 : index
      %c32 = arith.constant 32 : index
      %36 = vector.load %arg8[%c0_31, %c32] : memref<2x358xf32, #tpu.memory_space<vmem>>, vector<2x256xf32>
      %37 = vector.broadcast %35 : f32 to vector<2x256xf32>
      %38 = arith.mulf %37, %36 : vector<2x256xf32>
      %39 = arith.addf %34, %38 : vector<2x256xf32>
      %c21 = arith.constant 21 : index
      %40 = memref.load %arg2[%c21] : memref<98xf32, #tpu.memory_space<smem>>
      %c0_32 = arith.constant 0 : index
      %c48 = arith.constant 48 : index
      %41 = vector.load %arg8[%c0_32, %c48] : memref<2x358xf32, #tpu.memory_space<vmem>>, vector<2x256xf32>
      %42 = vector.broadcast %40 : f32 to vector<2x256xf32>
      %43 = arith.mulf %42, %41 : vector<2x256xf32>
      %44 = arith.addf %39, %43 : vector<2x256xf32>
      %c28 = arith.constant 28 : index
      %45 = memref.load %arg2[%c28] : memref<98xf32, #tpu.memory_space<smem>>
      %c0_33 = arith.constant 0 : index
      %c64 = arith.constant 64 : index
      %46 = vector.load %arg8[%c0_33, %c64] : memref<2x358xf32, #tpu.memory_space<vmem>>, vector<2x256xf32>
      %47 = vector.broadcast %45 : f32 to vector<2x256xf32>
      %48 = arith.mulf %47, %46 : vector<2x256xf32>
      %49 = arith.addf %44, %48 : vector<2x256xf32>
      %c35 = arith.constant 35 : index
      %50 = memref.load %arg2[%c35] : memref<98xf32, #tpu.memory_space<smem>>
      %c0_34 = arith.constant 0 : index
      %c80 = arith.constant 80 : index
      %51 = vector.load %arg8[%c0_34, %c80] : memref<2x358xf32, #tpu.memory_space<vmem>>, vector<2x256xf32>
      %52 = vector.broadcast %50 : f32 to vector<2x256xf32>
      %53 = arith.mulf %52, %51 : vector<2x256xf32>
      %54 = arith.addf %49, %53 : vector<2x256xf32>
      %c42 = arith.constant 42 : index
      %55 = memref.load %arg2[%c42] : memref<98xf32, #tpu.memory_space<smem>>
      %c0_35 = arith.constant 0 : index
      %c96 = arith.constant 96 : index
      %56 = vector.load %arg8[%c0_35, %c96] : memref<2x358xf32, #tpu.memory_space<vmem>>, vector<2x256xf32>
      %57 = vector.broadcast %55 : f32 to vector<2x256xf32>
      %58 = arith.mulf %57, %56 : vector<2x256xf32>
      %59 = arith.addf %54, %58 : vector<2x256xf32>
      %60 = vector.extract_strided_slice %22 {offsets = [0, 0, 0], sizes = [1, 1, 256], strides = [1, 1, 1]} : vector<7x1x256xf32> to vector<1x1x256xf32>
      %61 = vector.shape_cast %60 : vector<1x1x256xf32> to vector<1x256xf32>
      %62 = vector.broadcast %61 : vector<1x256xf32> to vector<2x256xf32>
      %63 = arith.mulf %59, %62 : vector<2x256xf32>
      %64 = arith.addf %23, %63 : vector<2x256xf32>
      %cst_36 = arith.constant 0.000000e+00 : f32
      %65 = vector.broadcast %cst_36 : f32 to vector<2x256xf32>
      %c1 = arith.constant 1 : index
      %66 = memref.load %arg2[%c1] : memref<98xf32, #tpu.memory_space<smem>>
      %c0_37 = arith.constant 0 : index
      %c1_38 = arith.constant 1 : index
      %67 = vector.load %arg8[%c0_37, %c1_38] : memref<2x358xf32, #tpu.memory_space<vmem>>, vector<2x256xf32>
      %68 = vector.broadcast %66 : f32 to vector<2x256xf32>
      %69 = arith.mulf %68, %67 : vector<2x256xf32>
      %70 = arith.addf %65, %69 : vector<2x256xf32>
      %c8 = arith.constant 8 : index
      %71 = memref.load %arg2[%c8] : memref<98xf32, #tpu.memory_space<smem>>
      %c0_39 = arith.constant 0 : index
      %c17 = arith.constant 17 : index
      %72 = vector.load %arg8[%c0_39, %c17] : memref<2x358xf32, #tpu.memory_space<vmem>>, vector<2x256xf32>
      %73 = vector.broadcast %71 : f32 to vector<2x256xf32>
      %74 = arith.mulf %73, %72 : vector<2x256xf32>
      %75 = arith.addf %70, %74 : vector<2x256xf32>
      %c15 = arith.constant 15 : index
      %76 = memref.load %arg2[%c15] : memref<98xf32, #tpu.memory_space<smem>>
      %c0_40 = arith.constant 0 : index
      %c33 = arith.constant 33 : index
      %77 = vector.load %arg8[%c0_40, %c33] : memref<2x358xf32, #tpu.memory_space<vmem>>, vector<2x256xf32>
      %78 = vector.broadcast %76 : f32 to vector<2x256xf32>
      %79 = arith.mulf %78, %77 : vector<2x256xf32>
      %80 = arith.addf %75, %79 : vector<2x256xf32>
      %c22 = arith.constant 22 : index
      %81 = memref.load %arg2[%c22] : memref<98xf32, #tpu.memory_space<smem>>
      %c0_41 = arith.constant 0 : index
      %c49 = arith.constant 49 : index
      %82 = vector.load %arg8[%c0_41, %c49] : memref<2x358xf32, #tpu.memory_space<vmem>>, vector<2x256xf32>
      %83 = vector.broadcast %81 : f32 to vector<2x256xf32>
      %84 = arith.mulf %83, %82 : vector<2x256xf32>
      %85 = arith.addf %80, %84 : vector<2x256xf32>
      %c29 = arith.constant 29 : index
      %86 = memref.load %arg2[%c29] : memref<98xf32, #tpu.memory_space<smem>>
      %c0_42 = arith.constant 0 : index
      %c65 = arith.constant 65 : index
      %87 = vector.load %arg8[%c0_42, %c65] : memref<2x358xf32, #tpu.memory_space<vmem>>, vector<2x256xf32>
      %88 = vector.broadcast %86 : f32 to vector<2x256xf32>
      %89 = arith.mulf %88, %87 : vector<2x256xf32>
      %90 = arith.addf %85, %89 : vector<2x256xf32>
      %c36 = arith.constant 36 : index
      %91 = memref.load %arg2[%c36] : memref<98xf32, #tpu.memory_space<smem>>
      %c0_43 = arith.constant 0 : index
      %c81 = arith.constant 81 : index
      %92 = vector.load %arg8[%c0_43, %c81] : memref<2x358xf32, #tpu.memory_space<vmem>>, vector<2x256xf32>
      %93 = vector.broadcast %91 : f32 to vector<2x256xf32>
      %94 = arith.mulf %93, %92 : vector<2x256xf32>
      %95 = arith.addf %90, %94 : vector<2x256xf32>
      %c43 = arith.constant 43 : index
      %96 = memref.load %arg2[%c43] : memref<98xf32, #tpu.memory_space<smem>>
      %c0_44 = arith.constant 0 : index
      %c97 = arith.constant 97 : index
      %97 = vector.load %arg8[%c0_44, %c97] : memref<2x358xf32, #tpu.memory_space<vmem>>, vector<2x256xf32>
      %98 = vector.broadcast %96 : f32 to vector<2x256xf32>
      %99 = arith.mulf %98, %97 : vector<2x256xf32>
      %100 = arith.addf %95, %99 : vector<2x256xf32>
      %101 = vector.extract_strided_slice %22 {offsets = [1, 0, 0], sizes = [1, 1, 256], strides = [1, 1, 1]} : vector<7x1x256xf32> to vector<1x1x256xf32>
      %102 = vector.shape_cast %101 : vector<1x1x256xf32> to vector<1x256xf32>
      %103 = vector.broadcast %102 : vector<1x256xf32> to vector<2x256xf32>
      %104 = arith.mulf %100, %103 : vector<2x256xf32>
      %105 = arith.addf %64, %104 : vector<2x256xf32>
      %cst_45 = arith.constant 0.000000e+00 : f32
      %106 = vector.broadcast %cst_45 : f32 to vector<2x256xf32>
      %c2 = arith.constant 2 : index
      %107 = memref.load %arg2[%c2] : memref<98xf32, #tpu.memory_space<smem>>
      %c0_46 = arith.constant 0 : index
      %c2_47 = arith.constant 2 : index
      %108 = vector.load %arg8[%c0_46, %c2_47] : memref<2x358xf32, #tpu.memory_space<vmem>>, vector<2x256xf32>
      %109 = vector.broadcast %107 : f32 to vector<2x256xf32>
      %110 = arith.mulf %109, %108 : vector<2x256xf32>
      %111 = arith.addf %106, %110 : vector<2x256xf32>
      %c9 = arith.constant 9 : index
      %112 = memref.load %arg2[%c9] : memref<98xf32, #tpu.memory_space<smem>>
      %c0_48 = arith.constant 0 : index
      %c18 = arith.constant 18 : index
      %113 = vector.load %arg8[%c0_48, %c18] : memref<2x358xf32, #tpu.memory_space<vmem>>, vector<2x256xf32>
      %114 = vector.broadcast %112 : f32 to vector<2x256xf32>
      %115 = arith.mulf %114, %113 : vector<2x256xf32>
      %116 = arith.addf %111, %115 : vector<2x256xf32>
      %c16_49 = arith.constant 16 : index
      %117 = memref.load %arg2[%c16_49] : memref<98xf32, #tpu.memory_space<smem>>
      %c0_50 = arith.constant 0 : index
      %c34 = arith.constant 34 : index
      %118 = vector.load %arg8[%c0_50, %c34] : memref<2x358xf32, #tpu.memory_space<vmem>>, vector<2x256xf32>
      %119 = vector.broadcast %117 : f32 to vector<2x256xf32>
      %120 = arith.mulf %119, %118 : vector<2x256xf32>
      %121 = arith.addf %116, %120 : vector<2x256xf32>
      %c23 = arith.constant 23 : index
      %122 = memref.load %arg2[%c23] : memref<98xf32, #tpu.memory_space<smem>>
      %c0_51 = arith.constant 0 : index
      %c50 = arith.constant 50 : index
      %123 = vector.load %arg8[%c0_51, %c50] : memref<2x358xf32, #tpu.memory_space<vmem>>, vector<2x256xf32>
      %124 = vector.broadcast %122 : f32 to vector<2x256xf32>
      %125 = arith.mulf %124, %123 : vector<2x256xf32>
      %126 = arith.addf %121, %125 : vector<2x256xf32>
      %c30 = arith.constant 30 : index
      %127 = memref.load %arg2[%c30] : memref<98xf32, #tpu.memory_space<smem>>
      %c0_52 = arith.constant 0 : index
      %c66 = arith.constant 66 : index
      %128 = vector.load %arg8[%c0_52, %c66] : memref<2x358xf32, #tpu.memory_space<vmem>>, vector<2x256xf32>
      %129 = vector.broadcast %127 : f32 to vector<2x256xf32>
      %130 = arith.mulf %129, %128 : vector<2x256xf32>
      %131 = arith.addf %126, %130 : vector<2x256xf32>
      %c37 = arith.constant 37 : index
      %132 = memref.load %arg2[%c37] : memref<98xf32, #tpu.memory_space<smem>>
      %c0_53 = arith.constant 0 : index
      %c82 = arith.constant 82 : index
      %133 = vector.load %arg8[%c0_53, %c82] : memref<2x358xf32, #tpu.memory_space<vmem>>, vector<2x256xf32>
      %134 = vector.broadcast %132 : f32 to vector<2x256xf32>
      %135 = arith.mulf %134, %133 : vector<2x256xf32>
      %136 = arith.addf %131, %135 : vector<2x256xf32>
      %c44 = arith.constant 44 : index
      %137 = memref.load %arg2[%c44] : memref<98xf32, #tpu.memory_space<smem>>
      %c0_54 = arith.constant 0 : index
      %c98 = arith.constant 98 : index
      %138 = vector.load %arg8[%c0_54, %c98] : memref<2x358xf32, #tpu.memory_space<vmem>>, vector<2x256xf32>
      %139 = vector.broadcast %137 : f32 to vector<2x256xf32>
      %140 = arith.mulf %139, %138 : vector<2x256xf32>
      %141 = arith.addf %136, %140 : vector<2x256xf32>
      %142 = vector.extract_strided_slice %22 {offsets = [2, 0, 0], sizes = [1, 1, 256], strides = [1, 1, 1]} : vector<7x1x256xf32> to vector<1x1x256xf32>
      %143 = vector.shape_cast %142 : vector<1x1x256xf32> to vector<1x256xf32>
      %144 = vector.broadcast %143 : vector<1x256xf32> to vector<2x256xf32>
      %145 = arith.mulf %141, %144 : vector<2x256xf32>
      %146 = arith.addf %105, %145 : vector<2x256xf32>
      %cst_55 = arith.constant 0.000000e+00 : f32
      %147 = vector.broadcast %cst_55 : f32 to vector<2x256xf32>
      %c3 = arith.constant 3 : index
      %148 = memref.load %arg2[%c3] : memref<98xf32, #tpu.memory_space<smem>>
      %c0_56 = arith.constant 0 : index
      %c3_57 = arith.constant 3 : index
      %149 = vector.load %arg8[%c0_56, %c3_57] : memref<2x358xf32, #tpu.memory_space<vmem>>, vector<2x256xf32>
      %150 = vector.broadcast %148 : f32 to vector<2x256xf32>
      %151 = arith.mulf %150, %149 : vector<2x256xf32>
      %152 = arith.addf %147, %151 : vector<2x256xf32>
      %c10 = arith.constant 10 : index
      %153 = memref.load %arg2[%c10] : memref<98xf32, #tpu.memory_space<smem>>
      %c0_58 = arith.constant 0 : index
      %c19 = arith.constant 19 : index
      %154 = vector.load %arg8[%c0_58, %c19] : memref<2x358xf32, #tpu.memory_space<vmem>>, vector<2x256xf32>
      %155 = vector.broadcast %153 : f32 to vector<2x256xf32>
      %156 = arith.mulf %155, %154 : vector<2x256xf32>
      %157 = arith.addf %152, %156 : vector<2x256xf32>
      %c17_59 = arith.constant 17 : index
      %158 = memref.load %arg2[%c17_59] : memref<98xf32, #tpu.memory_space<smem>>
      %c0_60 = arith.constant 0 : index
      %c35_61 = arith.constant 35 : index
      %159 = vector.load %arg8[%c0_60, %c35_61] : memref<2x358xf32, #tpu.memory_space<vmem>>, vector<2x256xf32>
      %160 = vector.broadcast %158 : f32 to vector<2x256xf32>
      %161 = arith.mulf %160, %159 : vector<2x256xf32>
      %162 = arith.addf %157, %161 : vector<2x256xf32>
      %c24 = arith.constant 24 : index
      %163 = memref.load %arg2[%c24] : memref<98xf32, #tpu.memory_space<smem>>
      %c0_62 = arith.constant 0 : index
      %c51_63 = arith.constant 51 : index
      %164 = vector.load %arg8[%c0_62, %c51_63] : memref<2x358xf32, #tpu.memory_space<vmem>>, vector<2x256xf32>
      %165 = vector.broadcast %163 : f32 to vector<2x256xf32>
      %166 = arith.mulf %165, %164 : vector<2x256xf32>
      %167 = arith.addf %162, %166 : vector<2x256xf32>
      %c31 = arith.constant 31 : index
      %168 = memref.load %arg2[%c31] : memref<98xf32, #tpu.memory_space<smem>>
      %c0_64 = arith.constant 0 : index
      %c67 = arith.constant 67 : index
      %169 = vector.load %arg8[%c0_64, %c67] : memref<2x358xf32, #tpu.memory_space<vmem>>, vector<2x256xf32>
      %170 = vector.broadcast %168 : f32 to vector<2x256xf32>
      %171 = arith.mulf %170, %169 : vector<2x256xf32>
      %172 = arith.addf %167, %171 : vector<2x256xf32>
      %c38 = arith.constant 38 : index
      %173 = memref.load %arg2[%c38] : memref<98xf32, #tpu.memory_space<smem>>
      %c0_65 = arith.constant 0 : index
      %c83 = arith.constant 83 : index
      %174 = vector.load %arg8[%c0_65, %c83] : memref<2x358xf32, #tpu.memory_space<vmem>>, vector<2x256xf32>
      %175 = vector.broadcast %173 : f32 to vector<2x256xf32>
      %176 = arith.mulf %175, %174 : vector<2x256xf32>
      %177 = arith.addf %172, %176 : vector<2x256xf32>
      %c45 = arith.constant 45 : index
      %178 = memref.load %arg2[%c45] : memref<98xf32, #tpu.memory_space<smem>>
      %c0_66 = arith.constant 0 : index
      %c99 = arith.constant 99 : index
      %179 = vector.load %arg8[%c0_66, %c99] : memref<2x358xf32, #tpu.memory_space<vmem>>, vector<2x256xf32>
      %180 = vector.broadcast %178 : f32 to vector<2x256xf32>
      %181 = arith.mulf %180, %179 : vector<2x256xf32>
      %182 = arith.addf %177, %181 : vector<2x256xf32>
      %183 = vector.extract_strided_slice %22 {offsets = [3, 0, 0], sizes = [1, 1, 256], strides = [1, 1, 1]} : vector<7x1x256xf32> to vector<1x1x256xf32>
      %184 = vector.shape_cast %183 : vector<1x1x256xf32> to vector<1x256xf32>
      %185 = vector.broadcast %184 : vector<1x256xf32> to vector<2x256xf32>
      %186 = arith.mulf %182, %185 : vector<2x256xf32>
      %187 = arith.addf %146, %186 : vector<2x256xf32>
      %cst_67 = arith.constant 0.000000e+00 : f32
      %188 = vector.broadcast %cst_67 : f32 to vector<2x256xf32>
      %c4 = arith.constant 4 : index
      %189 = memref.load %arg2[%c4] : memref<98xf32, #tpu.memory_space<smem>>
      %c0_68 = arith.constant 0 : index
      %c4_69 = arith.constant 4 : index
      %190 = vector.load %arg8[%c0_68, %c4_69] : memref<2x358xf32, #tpu.memory_space<vmem>>, vector<2x256xf32>
      %191 = vector.broadcast %189 : f32 to vector<2x256xf32>
      %192 = arith.mulf %191, %190 : vector<2x256xf32>
      %193 = arith.addf %188, %192 : vector<2x256xf32>
      %c11 = arith.constant 11 : index
      %194 = memref.load %arg2[%c11] : memref<98xf32, #tpu.memory_space<smem>>
      %c0_70 = arith.constant 0 : index
      %c20 = arith.constant 20 : index
      %195 = vector.load %arg8[%c0_70, %c20] : memref<2x358xf32, #tpu.memory_space<vmem>>, vector<2x256xf32>
      %196 = vector.broadcast %194 : f32 to vector<2x256xf32>
      %197 = arith.mulf %196, %195 : vector<2x256xf32>
      %198 = arith.addf %193, %197 : vector<2x256xf32>
      %c18_71 = arith.constant 18 : index
      %199 = memref.load %arg2[%c18_71] : memref<98xf32, #tpu.memory_space<smem>>
      %c0_72 = arith.constant 0 : index
      %c36_73 = arith.constant 36 : index
      %200 = vector.load %arg8[%c0_72, %c36_73] : memref<2x358xf32, #tpu.memory_space<vmem>>, vector<2x256xf32>
      %201 = vector.broadcast %199 : f32 to vector<2x256xf32>
      %202 = arith.mulf %201, %200 : vector<2x256xf32>
      %203 = arith.addf %198, %202 : vector<2x256xf32>
      %c25 = arith.constant 25 : index
      %204 = memref.load %arg2[%c25] : memref<98xf32, #tpu.memory_space<smem>>
      %c0_74 = arith.constant 0 : index
      %c52 = arith.constant 52 : index
      %205 = vector.load %arg8[%c0_74, %c52] : memref<2x358xf32, #tpu.memory_space<vmem>>, vector<2x256xf32>
      %206 = vector.broadcast %204 : f32 to vector<2x256xf32>
      %207 = arith.mulf %206, %205 : vector<2x256xf32>
      %208 = arith.addf %203, %207 : vector<2x256xf32>
      %c32_75 = arith.constant 32 : index
      %209 = memref.load %arg2[%c32_75] : memref<98xf32, #tpu.memory_space<smem>>
      %c0_76 = arith.constant 0 : index
      %c68 = arith.constant 68 : index
      %210 = vector.load %arg8[%c0_76, %c68] : memref<2x358xf32, #tpu.memory_space<vmem>>, vector<2x256xf32>
      %211 = vector.broadcast %209 : f32 to vector<2x256xf32>
      %212 = arith.mulf %211, %210 : vector<2x256xf32>
      %213 = arith.addf %208, %212 : vector<2x256xf32>
      %c39 = arith.constant 39 : index
      %214 = memref.load %arg2[%c39] : memref<98xf32, #tpu.memory_space<smem>>
      %c0_77 = arith.constant 0 : index
      %c84 = arith.constant 84 : index
      %215 = vector.load %arg8[%c0_77, %c84] : memref<2x358xf32, #tpu.memory_space<vmem>>, vector<2x256xf32>
      %216 = vector.broadcast %214 : f32 to vector<2x256xf32>
      %217 = arith.mulf %216, %215 : vector<2x256xf32>
      %218 = arith.addf %213, %217 : vector<2x256xf32>
      %c46 = arith.constant 46 : index
      %219 = memref.load %arg2[%c46] : memref<98xf32, #tpu.memory_space<smem>>
      %c0_78 = arith.constant 0 : index
      %c100 = arith.constant 100 : index
      %220 = vector.load %arg8[%c0_78, %c100] : memref<2x358xf32, #tpu.memory_space<vmem>>, vector<2x256xf32>
      %221 = vector.broadcast %219 : f32 to vector<2x256xf32>
      %222 = arith.mulf %221, %220 : vector<2x256xf32>
      %223 = arith.addf %218, %222 : vector<2x256xf32>
      %224 = vector.extract_strided_slice %22 {offsets = [4, 0, 0], sizes = [1, 1, 256], strides = [1, 1, 1]} : vector<7x1x256xf32> to vector<1x1x256xf32>
      %225 = vector.shape_cast %224 : vector<1x1x256xf32> to vector<1x256xf32>
      %226 = vector.broadcast %225 : vector<1x256xf32> to vector<2x256xf32>
      %227 = arith.mulf %223, %226 : vector<2x256xf32>
      %228 = arith.addf %187, %227 : vector<2x256xf32>
      %cst_79 = arith.constant 0.000000e+00 : f32
      %229 = vector.broadcast %cst_79 : f32 to vector<2x256xf32>
      %c5 = arith.constant 5 : index
      %230 = memref.load %arg2[%c5] : memref<98xf32, #tpu.memory_space<smem>>
      %c0_80 = arith.constant 0 : index
      %c5_81 = arith.constant 5 : index
      %231 = vector.load %arg8[%c0_80, %c5_81] : memref<2x358xf32, #tpu.memory_space<vmem>>, vector<2x256xf32>
      %232 = vector.broadcast %230 : f32 to vector<2x256xf32>
      %233 = arith.mulf %232, %231 : vector<2x256xf32>
      %234 = arith.addf %229, %233 : vector<2x256xf32>
      %c12 = arith.constant 12 : index
      %235 = memref.load %arg2[%c12] : memref<98xf32, #tpu.memory_space<smem>>
      %c0_82 = arith.constant 0 : index
      %c21_83 = arith.constant 21 : index
      %236 = vector.load %arg8[%c0_82, %c21_83] : memref<2x358xf32, #tpu.memory_space<vmem>>, vector<2x256xf32>
      %237 = vector.broadcast %235 : f32 to vector<2x256xf32>
      %238 = arith.mulf %237, %236 : vector<2x256xf32>
      %239 = arith.addf %234, %238 : vector<2x256xf32>
      %c19_84 = arith.constant 19 : index
      %240 = memref.load %arg2[%c19_84] : memref<98xf32, #tpu.memory_space<smem>>
      %c0_85 = arith.constant 0 : index
      %c37_86 = arith.constant 37 : index
      %241 = vector.load %arg8[%c0_85, %c37_86] : memref<2x358xf32, #tpu.memory_space<vmem>>, vector<2x256xf32>
      %242 = vector.broadcast %240 : f32 to vector<2x256xf32>
      %243 = arith.mulf %242, %241 : vector<2x256xf32>
      %244 = arith.addf %239, %243 : vector<2x256xf32>
      %c26 = arith.constant 26 : index
      %245 = memref.load %arg2[%c26] : memref<98xf32, #tpu.memory_space<smem>>
      %c0_87 = arith.constant 0 : index
      %c53 = arith.constant 53 : index
      %246 = vector.load %arg8[%c0_87, %c53] : memref<2x358xf32, #tpu.memory_space<vmem>>, vector<2x256xf32>
      %247 = vector.broadcast %245 : f32 to vector<2x256xf32>
      %248 = arith.mulf %247, %246 : vector<2x256xf32>
      %249 = arith.addf %244, %248 : vector<2x256xf32>
      %c33_88 = arith.constant 33 : index
      %250 = memref.load %arg2[%c33_88] : memref<98xf32, #tpu.memory_space<smem>>
      %c0_89 = arith.constant 0 : index
      %c69 = arith.constant 69 : index
      %251 = vector.load %arg8[%c0_89, %c69] : memref<2x358xf32, #tpu.memory_space<vmem>>, vector<2x256xf32>
      %252 = vector.broadcast %250 : f32 to vector<2x256xf32>
      %253 = arith.mulf %252, %251 : vector<2x256xf32>
      %254 = arith.addf %249, %253 : vector<2x256xf32>
      %c40 = arith.constant 40 : index
      %255 = memref.load %arg2[%c40] : memref<98xf32, #tpu.memory_space<smem>>
      %c0_90 = arith.constant 0 : index
      %c85 = arith.constant 85 : index
      %256 = vector.load %arg8[%c0_90, %c85] : memref<2x358xf32, #tpu.memory_space<vmem>>, vector<2x256xf32>
      %257 = vector.broadcast %255 : f32 to vector<2x256xf32>
      %258 = arith.mulf %257, %256 : vector<2x256xf32>
      %259 = arith.addf %254, %258 : vector<2x256xf32>
      %c47 = arith.constant 47 : index
      %260 = memref.load %arg2[%c47] : memref<98xf32, #tpu.memory_space<smem>>
      %c0_91 = arith.constant 0 : index
      %c101 = arith.constant 101 : index
      %261 = vector.load %arg8[%c0_91, %c101] : memref<2x358xf32, #tpu.memory_space<vmem>>, vector<2x256xf32>
      %262 = vector.broadcast %260 : f32 to vector<2x256xf32>
      %263 = arith.mulf %262, %261 : vector<2x256xf32>
      %264 = arith.addf %259, %263 : vector<2x256xf32>
      %265 = vector.extract_strided_slice %22 {offsets = [5, 0, 0], sizes = [1, 1, 256], strides = [1, 1, 1]} : vector<7x1x256xf32> to vector<1x1x256xf32>
      %266 = vector.shape_cast %265 : vector<1x1x256xf32> to vector<1x256xf32>
      %267 = vector.broadcast %266 : vector<1x256xf32> to vector<2x256xf32>
      %268 = arith.mulf %264, %267 : vector<2x256xf32>
      %269 = arith.addf %228, %268 : vector<2x256xf32>
      %cst_92 = arith.constant 0.000000e+00 : f32
      %270 = vector.broadcast %cst_92 : f32 to vector<2x256xf32>
      %c6 = arith.constant 6 : index
      %271 = memref.load %arg2[%c6] : memref<98xf32, #tpu.memory_space<smem>>
      %c0_93 = arith.constant 0 : index
      %c6_94 = arith.constant 6 : index
      %272 = vector.load %arg8[%c0_93, %c6_94] : memref<2x358xf32, #tpu.memory_space<vmem>>, vector<2x256xf32>
      %273 = vector.broadcast %271 : f32 to vector<2x256xf32>
      %274 = arith.mulf %273, %272 : vector<2x256xf32>
      %275 = arith.addf %270, %274 : vector<2x256xf32>
      %c13 = arith.constant 13 : index
      %276 = memref.load %arg2[%c13] : memref<98xf32, #tpu.memory_space<smem>>
      %c0_95 = arith.constant 0 : index
      %c22_96 = arith.constant 22 : index
      %277 = vector.load %arg8[%c0_95, %c22_96] : memref<2x358xf32, #tpu.memory_space<vmem>>, vector<2x256xf32>
      %278 = vector.broadcast %276 : f32 to vector<2x256xf32>
      %279 = arith.mulf %278, %277 : vector<2x256xf32>
      %280 = arith.addf %275, %279 : vector<2x256xf32>
      %c20_97 = arith.constant 20 : index
      %281 = memref.load %arg2[%c20_97] : memref<98xf32, #tpu.memory_space<smem>>
      %c0_98 = arith.constant 0 : index
      %c38_99 = arith.constant 38 : index
      %282 = vector.load %arg8[%c0_98, %c38_99] : memref<2x358xf32, #tpu.memory_space<vmem>>, vector<2x256xf32>
      %283 = vector.broadcast %281 : f32 to vector<2x256xf32>
      %284 = arith.mulf %283, %282 : vector<2x256xf32>
      %285 = arith.addf %280, %284 : vector<2x256xf32>
      %c27 = arith.constant 27 : index
      %286 = memref.load %arg2[%c27] : memref<98xf32, #tpu.memory_space<smem>>
      %c0_100 = arith.constant 0 : index
      %c54 = arith.constant 54 : index
      %287 = vector.load %arg8[%c0_100, %c54] : memref<2x358xf32, #tpu.memory_space<vmem>>, vector<2x256xf32>
      %288 = vector.broadcast %286 : f32 to vector<2x256xf32>
      %289 = arith.mulf %288, %287 : vector<2x256xf32>
      %290 = arith.addf %285, %289 : vector<2x256xf32>
      %c34_101 = arith.constant 34 : index
      %291 = memref.load %arg2[%c34_101] : memref<98xf32, #tpu.memory_space<smem>>
      %c0_102 = arith.constant 0 : index
      %c70 = arith.constant 70 : index
      %292 = vector.load %arg8[%c0_102, %c70] : memref<2x358xf32, #tpu.memory_space<vmem>>, vector<2x256xf32>
      %293 = vector.broadcast %291 : f32 to vector<2x256xf32>
      %294 = arith.mulf %293, %292 : vector<2x256xf32>
      %295 = arith.addf %290, %294 : vector<2x256xf32>
      %c41 = arith.constant 41 : index
      %296 = memref.load %arg2[%c41] : memref<98xf32, #tpu.memory_space<smem>>
      %c0_103 = arith.constant 0 : index
      %c86 = arith.constant 86 : index
      %297 = vector.load %arg8[%c0_103, %c86] : memref<2x358xf32, #tpu.memory_space<vmem>>, vector<2x256xf32>
      %298 = vector.broadcast %296 : f32 to vector<2x256xf32>
      %299 = arith.mulf %298, %297 : vector<2x256xf32>
      %300 = arith.addf %295, %299 : vector<2x256xf32>
      %c48_104 = arith.constant 48 : index
      %301 = memref.load %arg2[%c48_104] : memref<98xf32, #tpu.memory_space<smem>>
      %c0_105 = arith.constant 0 : index
      %c102 = arith.constant 102 : index
      %302 = vector.load %arg8[%c0_105, %c102] : memref<2x358xf32, #tpu.memory_space<vmem>>, vector<2x256xf32>
      %303 = vector.broadcast %301 : f32 to vector<2x256xf32>
      %304 = arith.mulf %303, %302 : vector<2x256xf32>
      %305 = arith.addf %300, %304 : vector<2x256xf32>
      %306 = vector.extract_strided_slice %22 {offsets = [6, 0, 0], sizes = [1, 1, 256], strides = [1, 1, 1]} : vector<7x1x256xf32> to vector<1x1x256xf32>
      %307 = vector.shape_cast %306 : vector<1x1x256xf32> to vector<1x256xf32>
      %308 = vector.broadcast %307 : vector<1x256xf32> to vector<2x256xf32>
      %309 = arith.mulf %305, %308 : vector<2x256xf32>
      %310 = arith.addf %269, %309 : vector<2x256xf32>
      %cst_106 = arith.constant 0.000000e+00 : f32
      %311 = vector.broadcast %cst_106 : f32 to vector<2x256xf32>
      %c49_107 = arith.constant 49 : index
      %312 = memref.load %arg2[%c49_107] : memref<98xf32, #tpu.memory_space<smem>>
      %c0_108 = arith.constant 0 : index
      %c0_109 = arith.constant 0 : index
      %313 = vector.load %arg9[%c0_108, %c0_109] : memref<2x358xf32, #tpu.memory_space<vmem>>, vector<2x256xf32>
      %314 = vector.broadcast %312 : f32 to vector<2x256xf32>
      %315 = arith.mulf %314, %313 : vector<2x256xf32>
      %316 = arith.addf %311, %315 : vector<2x256xf32>
      %c56 = arith.constant 56 : index
      %317 = memref.load %arg2[%c56] : memref<98xf32, #tpu.memory_space<smem>>
      %c0_110 = arith.constant 0 : index
      %c16_111 = arith.constant 16 : index
      %318 = vector.load %arg9[%c0_110, %c16_111] : memref<2x358xf32, #tpu.memory_space<vmem>>, vector<2x256xf32>
      %319 = vector.broadcast %317 : f32 to vector<2x256xf32>
      %320 = arith.mulf %319, %318 : vector<2x256xf32>
      %321 = arith.addf %316, %320 : vector<2x256xf32>
      %c63 = arith.constant 63 : index
      %322 = memref.load %arg2[%c63] : memref<98xf32, #tpu.memory_space<smem>>
      %c0_112 = arith.constant 0 : index
      %c32_113 = arith.constant 32 : index
      %323 = vector.load %arg9[%c0_112, %c32_113] : memref<2x358xf32, #tpu.memory_space<vmem>>, vector<2x256xf32>
      %324 = vector.broadcast %322 : f32 to vector<2x256xf32>
      %325 = arith.mulf %324, %323 : vector<2x256xf32>
      %326 = arith.addf %321, %325 : vector<2x256xf32>
      %c70_114 = arith.constant 70 : index
      %327 = memref.load %arg2[%c70_114] : memref<98xf32, #tpu.memory_space<smem>>
      %c0_115 = arith.constant 0 : index
      %c48_116 = arith.constant 48 : index
      %328 = vector.load %arg9[%c0_115, %c48_116] : memref<2x358xf32, #tpu.memory_space<vmem>>, vector<2x256xf32>
      %329 = vector.broadcast %327 : f32 to vector<2x256xf32>
      %330 = arith.mulf %329, %328 : vector<2x256xf32>
      %331 = arith.addf %326, %330 : vector<2x256xf32>
      %c77 = arith.constant 77 : index
      %332 = memref.load %arg2[%c77] : memref<98xf32, #tpu.memory_space<smem>>
      %c0_117 = arith.constant 0 : index
      %c64_118 = arith.constant 64 : index
      %333 = vector.load %arg9[%c0_117, %c64_118] : memref<2x358xf32, #tpu.memory_space<vmem>>, vector<2x256xf32>
      %334 = vector.broadcast %332 : f32 to vector<2x256xf32>
      %335 = arith.mulf %334, %333 : vector<2x256xf32>
      %336 = arith.addf %331, %335 : vector<2x256xf32>
      %c84_119 = arith.constant 84 : index
      %337 = memref.load %arg2[%c84_119] : memref<98xf32, #tpu.memory_space<smem>>
      %c0_120 = arith.constant 0 : index
      %c80_121 = arith.constant 80 : index
      %338 = vector.load %arg9[%c0_120, %c80_121] : memref<2x358xf32, #tpu.memory_space<vmem>>, vector<2x256xf32>
      %339 = vector.broadcast %337 : f32 to vector<2x256xf32>
      %340 = arith.mulf %339, %338 : vector<2x256xf32>
      %341 = arith.addf %336, %340 : vector<2x256xf32>
      %c91 = arith.constant 91 : index
      %342 = memref.load %arg2[%c91] : memref<98xf32, #tpu.memory_space<smem>>
      %c0_122 = arith.constant 0 : index
      %c96_123 = arith.constant 96 : index
      %343 = vector.load %arg9[%c0_122, %c96_123] : memref<2x358xf32, #tpu.memory_space<vmem>>, vector<2x256xf32>
      %344 = vector.broadcast %342 : f32 to vector<2x256xf32>
      %345 = arith.mulf %344, %343 : vector<2x256xf32>
      %346 = arith.addf %341, %345 : vector<2x256xf32>
      %347 = vector.extract_strided_slice %22 {offsets = [0, 0, 0], sizes = [1, 1, 256], strides = [1, 1, 1]} : vector<7x1x256xf32> to vector<1x1x256xf32>
      %348 = vector.shape_cast %347 : vector<1x1x256xf32> to vector<1x256xf32>
      %349 = vector.broadcast %348 : vector<1x256xf32> to vector<2x256xf32>
      %350 = arith.mulf %346, %349 : vector<2x256xf32>
      %351 = arith.addf %310, %350 : vector<2x256xf32>
      %cst_124 = arith.constant 0.000000e+00 : f32
      %352 = vector.broadcast %cst_124 : f32 to vector<2x256xf32>
      %c50_125 = arith.constant 50 : index
      %353 = memref.load %arg2[%c50_125] : memref<98xf32, #tpu.memory_space<smem>>
      %c0_126 = arith.constant 0 : index
      %c1_127 = arith.constant 1 : index
      %354 = vector.load %arg9[%c0_126, %c1_127] : memref<2x358xf32, #tpu.memory_space<vmem>>, vector<2x256xf32>
      %355 = vector.broadcast %353 : f32 to vector<2x256xf32>
      %356 = arith.mulf %355, %354 : vector<2x256xf32>
      %357 = arith.addf %352, %356 : vector<2x256xf32>
      %c57 = arith.constant 57 : index
      %358 = memref.load %arg2[%c57] : memref<98xf32, #tpu.memory_space<smem>>
      %c0_128 = arith.constant 0 : index
      %c17_129 = arith.constant 17 : index
      %359 = vector.load %arg9[%c0_128, %c17_129] : memref<2x358xf32, #tpu.memory_space<vmem>>, vector<2x256xf32>
      %360 = vector.broadcast %358 : f32 to vector<2x256xf32>
      %361 = arith.mulf %360, %359 : vector<2x256xf32>
      %362 = arith.addf %357, %361 : vector<2x256xf32>
      %c64_130 = arith.constant 64 : index
      %363 = memref.load %arg2[%c64_130] : memref<98xf32, #tpu.memory_space<smem>>
      %c0_131 = arith.constant 0 : index
      %c33_132 = arith.constant 33 : index
      %364 = vector.load %arg9[%c0_131, %c33_132] : memref<2x358xf32, #tpu.memory_space<vmem>>, vector<2x256xf32>
      %365 = vector.broadcast %363 : f32 to vector<2x256xf32>
      %366 = arith.mulf %365, %364 : vector<2x256xf32>
      %367 = arith.addf %362, %366 : vector<2x256xf32>
      %c71 = arith.constant 71 : index
      %368 = memref.load %arg2[%c71] : memref<98xf32, #tpu.memory_space<smem>>
      %c0_133 = arith.constant 0 : index
      %c49_134 = arith.constant 49 : index
      %369 = vector.load %arg9[%c0_133, %c49_134] : memref<2x358xf32, #tpu.memory_space<vmem>>, vector<2x256xf32>
      %370 = vector.broadcast %368 : f32 to vector<2x256xf32>
      %371 = arith.mulf %370, %369 : vector<2x256xf32>
      %372 = arith.addf %367, %371 : vector<2x256xf32>
      %c78 = arith.constant 78 : index
      %373 = memref.load %arg2[%c78] : memref<98xf32, #tpu.memory_space<smem>>
      %c0_135 = arith.constant 0 : index
      %c65_136 = arith.constant 65 : index
      %374 = vector.load %arg9[%c0_135, %c65_136] : memref<2x358xf32, #tpu.memory_space<vmem>>, vector<2x256xf32>
      %375 = vector.broadcast %373 : f32 to vector<2x256xf32>
      %376 = arith.mulf %375, %374 : vector<2x256xf32>
      %377 = arith.addf %372, %376 : vector<2x256xf32>
      %c85_137 = arith.constant 85 : index
      %378 = memref.load %arg2[%c85_137] : memref<98xf32, #tpu.memory_space<smem>>
      %c0_138 = arith.constant 0 : index
      %c81_139 = arith.constant 81 : index
      %379 = vector.load %arg9[%c0_138, %c81_139] : memref<2x358xf32, #tpu.memory_space<vmem>>, vector<2x256xf32>
      %380 = vector.broadcast %378 : f32 to vector<2x256xf32>
      %381 = arith.mulf %380, %379 : vector<2x256xf32>
      %382 = arith.addf %377, %381 : vector<2x256xf32>
      %c92 = arith.constant 92 : index
      %383 = memref.load %arg2[%c92] : memref<98xf32, #tpu.memory_space<smem>>
      %c0_140 = arith.constant 0 : index
      %c97_141 = arith.constant 97 : index
      %384 = vector.load %arg9[%c0_140, %c97_141] : memref<2x358xf32, #tpu.memory_space<vmem>>, vector<2x256xf32>
      %385 = vector.broadcast %383 : f32 to vector<2x256xf32>
      %386 = arith.mulf %385, %384 : vector<2x256xf32>
      %387 = arith.addf %382, %386 : vector<2x256xf32>
      %388 = vector.extract_strided_slice %22 {offsets = [1, 0, 0], sizes = [1, 1, 256], strides = [1, 1, 1]} : vector<7x1x256xf32> to vector<1x1x256xf32>
      %389 = vector.shape_cast %388 : vector<1x1x256xf32> to vector<1x256xf32>
      %390 = vector.broadcast %389 : vector<1x256xf32> to vector<2x256xf32>
      %391 = arith.mulf %387, %390 : vector<2x256xf32>
      %392 = arith.addf %351, %391 : vector<2x256xf32>
      %cst_142 = arith.constant 0.000000e+00 : f32
      %393 = vector.broadcast %cst_142 : f32 to vector<2x256xf32>
      %c51_143 = arith.constant 51 : index
      %394 = memref.load %arg2[%c51_143] : memref<98xf32, #tpu.memory_space<smem>>
      %c0_144 = arith.constant 0 : index
      %c2_145 = arith.constant 2 : index
      %395 = vector.load %arg9[%c0_144, %c2_145] : memref<2x358xf32, #tpu.memory_space<vmem>>, vector<2x256xf32>
      %396 = vector.broadcast %394 : f32 to vector<2x256xf32>
      %397 = arith.mulf %396, %395 : vector<2x256xf32>
      %398 = arith.addf %393, %397 : vector<2x256xf32>
      %c58 = arith.constant 58 : index
      %399 = memref.load %arg2[%c58] : memref<98xf32, #tpu.memory_space<smem>>
      %c0_146 = arith.constant 0 : index
      %c18_147 = arith.constant 18 : index
      %400 = vector.load %arg9[%c0_146, %c18_147] : memref<2x358xf32, #tpu.memory_space<vmem>>, vector<2x256xf32>
      %401 = vector.broadcast %399 : f32 to vector<2x256xf32>
      %402 = arith.mulf %401, %400 : vector<2x256xf32>
      %403 = arith.addf %398, %402 : vector<2x256xf32>
      %c65_148 = arith.constant 65 : index
      %404 = memref.load %arg2[%c65_148] : memref<98xf32, #tpu.memory_space<smem>>
      %c0_149 = arith.constant 0 : index
      %c34_150 = arith.constant 34 : index
      %405 = vector.load %arg9[%c0_149, %c34_150] : memref<2x358xf32, #tpu.memory_space<vmem>>, vector<2x256xf32>
      %406 = vector.broadcast %404 : f32 to vector<2x256xf32>
      %407 = arith.mulf %406, %405 : vector<2x256xf32>
      %408 = arith.addf %403, %407 : vector<2x256xf32>
      %c72 = arith.constant 72 : index
      %409 = memref.load %arg2[%c72] : memref<98xf32, #tpu.memory_space<smem>>
      %c0_151 = arith.constant 0 : index
      %c50_152 = arith.constant 50 : index
      %410 = vector.load %arg9[%c0_151, %c50_152] : memref<2x358xf32, #tpu.memory_space<vmem>>, vector<2x256xf32>
      %411 = vector.broadcast %409 : f32 to vector<2x256xf32>
      %412 = arith.mulf %411, %410 : vector<2x256xf32>
      %413 = arith.addf %408, %412 : vector<2x256xf32>
      %c79 = arith.constant 79 : index
      %414 = memref.load %arg2[%c79] : memref<98xf32, #tpu.memory_space<smem>>
      %c0_153 = arith.constant 0 : index
      %c66_154 = arith.constant 66 : index
      %415 = vector.load %arg9[%c0_153, %c66_154] : memref<2x358xf32, #tpu.memory_space<vmem>>, vector<2x256xf32>
      %416 = vector.broadcast %414 : f32 to vector<2x256xf32>
      %417 = arith.mulf %416, %415 : vector<2x256xf32>
      %418 = arith.addf %413, %417 : vector<2x256xf32>
      %c86_155 = arith.constant 86 : index
      %419 = memref.load %arg2[%c86_155] : memref<98xf32, #tpu.memory_space<smem>>
      %c0_156 = arith.constant 0 : index
      %c82_157 = arith.constant 82 : index
      %420 = vector.load %arg9[%c0_156, %c82_157] : memref<2x358xf32, #tpu.memory_space<vmem>>, vector<2x256xf32>
      %421 = vector.broadcast %419 : f32 to vector<2x256xf32>
      %422 = arith.mulf %421, %420 : vector<2x256xf32>
      %423 = arith.addf %418, %422 : vector<2x256xf32>
      %c93 = arith.constant 93 : index
      %424 = memref.load %arg2[%c93] : memref<98xf32, #tpu.memory_space<smem>>
      %c0_158 = arith.constant 0 : index
      %c98_159 = arith.constant 98 : index
      %425 = vector.load %arg9[%c0_158, %c98_159] : memref<2x358xf32, #tpu.memory_space<vmem>>, vector<2x256xf32>
      %426 = vector.broadcast %424 : f32 to vector<2x256xf32>
      %427 = arith.mulf %426, %425 : vector<2x256xf32>
      %428 = arith.addf %423, %427 : vector<2x256xf32>
      %429 = vector.extract_strided_slice %22 {offsets = [2, 0, 0], sizes = [1, 1, 256], strides = [1, 1, 1]} : vector<7x1x256xf32> to vector<1x1x256xf32>
      %430 = vector.shape_cast %429 : vector<1x1x256xf32> to vector<1x256xf32>
      %431 = vector.broadcast %430 : vector<1x256xf32> to vector<2x256xf32>
      %432 = arith.mulf %428, %431 : vector<2x256xf32>
      %433 = arith.addf %392, %432 : vector<2x256xf32>
      %cst_160 = arith.constant 0.000000e+00 : f32
      %434 = vector.broadcast %cst_160 : f32 to vector<2x256xf32>
      %c52_161 = arith.constant 52 : index
      %435 = memref.load %arg2[%c52_161] : memref<98xf32, #tpu.memory_space<smem>>
      %c0_162 = arith.constant 0 : index
      %c3_163 = arith.constant 3 : index
      %436 = vector.load %arg9[%c0_162, %c3_163] : memref<2x358xf32, #tpu.memory_space<vmem>>, vector<2x256xf32>
      %437 = vector.broadcast %435 : f32 to vector<2x256xf32>
      %438 = arith.mulf %437, %436 : vector<2x256xf32>
      %439 = arith.addf %434, %438 : vector<2x256xf32>
      %c59 = arith.constant 59 : index
      %440 = memref.load %arg2[%c59] : memref<98xf32, #tpu.memory_space<smem>>
      %c0_164 = arith.constant 0 : index
      %c19_165 = arith.constant 19 : index
      %441 = vector.load %arg9[%c0_164, %c19_165] : memref<2x358xf32, #tpu.memory_space<vmem>>, vector<2x256xf32>
      %442 = vector.broadcast %440 : f32 to vector<2x256xf32>
      %443 = arith.mulf %442, %441 : vector<2x256xf32>
      %444 = arith.addf %439, %443 : vector<2x256xf32>
      %c66_166 = arith.constant 66 : index
      %445 = memref.load %arg2[%c66_166] : memref<98xf32, #tpu.memory_space<smem>>
      %c0_167 = arith.constant 0 : index
      %c35_168 = arith.constant 35 : index
      %446 = vector.load %arg9[%c0_167, %c35_168] : memref<2x358xf32, #tpu.memory_space<vmem>>, vector<2x256xf32>
      %447 = vector.broadcast %445 : f32 to vector<2x256xf32>
      %448 = arith.mulf %447, %446 : vector<2x256xf32>
      %449 = arith.addf %444, %448 : vector<2x256xf32>
      %c73 = arith.constant 73 : index
      %450 = memref.load %arg2[%c73] : memref<98xf32, #tpu.memory_space<smem>>
      %c0_169 = arith.constant 0 : index
      %c51_170 = arith.constant 51 : index
      %451 = vector.load %arg9[%c0_169, %c51_170] : memref<2x358xf32, #tpu.memory_space<vmem>>, vector<2x256xf32>
      %452 = vector.broadcast %450 : f32 to vector<2x256xf32>
      %453 = arith.mulf %452, %451 : vector<2x256xf32>
      %454 = arith.addf %449, %453 : vector<2x256xf32>
      %c80_171 = arith.constant 80 : index
      %455 = memref.load %arg2[%c80_171] : memref<98xf32, #tpu.memory_space<smem>>
      %c0_172 = arith.constant 0 : index
      %c67_173 = arith.constant 67 : index
      %456 = vector.load %arg9[%c0_172, %c67_173] : memref<2x358xf32, #tpu.memory_space<vmem>>, vector<2x256xf32>
      %457 = vector.broadcast %455 : f32 to vector<2x256xf32>
      %458 = arith.mulf %457, %456 : vector<2x256xf32>
      %459 = arith.addf %454, %458 : vector<2x256xf32>
      %c87 = arith.constant 87 : index
      %460 = memref.load %arg2[%c87] : memref<98xf32, #tpu.memory_space<smem>>
      %c0_174 = arith.constant 0 : index
      %c83_175 = arith.constant 83 : index
      %461 = vector.load %arg9[%c0_174, %c83_175] : memref<2x358xf32, #tpu.memory_space<vmem>>, vector<2x256xf32>
      %462 = vector.broadcast %460 : f32 to vector<2x256xf32>
      %463 = arith.mulf %462, %461 : vector<2x256xf32>
      %464 = arith.addf %459, %463 : vector<2x256xf32>
      %c94 = arith.constant 94 : index
      %465 = memref.load %arg2[%c94] : memref<98xf32, #tpu.memory_space<smem>>
      %c0_176 = arith.constant 0 : index
      %c99_177 = arith.constant 99 : index
      %466 = vector.load %arg9[%c0_176, %c99_177] : memref<2x358xf32, #tpu.memory_space<vmem>>, vector<2x256xf32>
      %467 = vector.broadcast %465 : f32 to vector<2x256xf32>
      %468 = arith.mulf %467, %466 : vector<2x256xf32>
      %469 = arith.addf %464, %468 : vector<2x256xf32>
      %470 = vector.extract_strided_slice %22 {offsets = [3, 0, 0], sizes = [1, 1, 256], strides = [1, 1, 1]} : vector<7x1x256xf32> to vector<1x1x256xf32>
      %471 = vector.shape_cast %470 : vector<1x1x256xf32> to vector<1x256xf32>
      %472 = vector.broadcast %471 : vector<1x256xf32> to vector<2x256xf32>
      %473 = arith.mulf %469, %472 : vector<2x256xf32>
      %474 = arith.addf %433, %473 : vector<2x256xf32>
      %cst_178 = arith.constant 0.000000e+00 : f32
      %475 = vector.broadcast %cst_178 : f32 to vector<2x256xf32>
      %c53_179 = arith.constant 53 : index
      %476 = memref.load %arg2[%c53_179] : memref<98xf32, #tpu.memory_space<smem>>
      %c0_180 = arith.constant 0 : index
      %c4_181 = arith.constant 4 : index
      %477 = vector.load %arg9[%c0_180, %c4_181] : memref<2x358xf32, #tpu.memory_space<vmem>>, vector<2x256xf32>
      %478 = vector.broadcast %476 : f32 to vector<2x256xf32>
      %479 = arith.mulf %478, %477 : vector<2x256xf32>
      %480 = arith.addf %475, %479 : vector<2x256xf32>
      %c60 = arith.constant 60 : index
      %481 = memref.load %arg2[%c60] : memref<98xf32, #tpu.memory_space<smem>>
      %c0_182 = arith.constant 0 : index
      %c20_183 = arith.constant 20 : index
      %482 = vector.load %arg9[%c0_182, %c20_183] : memref<2x358xf32, #tpu.memory_space<vmem>>, vector<2x256xf32>
      %483 = vector.broadcast %481 : f32 to vector<2x256xf32>
      %484 = arith.mulf %483, %482 : vector<2x256xf32>
      %485 = arith.addf %480, %484 : vector<2x256xf32>
      %c67_184 = arith.constant 67 : index
      %486 = memref.load %arg2[%c67_184] : memref<98xf32, #tpu.memory_space<smem>>
      %c0_185 = arith.constant 0 : index
      %c36_186 = arith.constant 36 : index
      %487 = vector.load %arg9[%c0_185, %c36_186] : memref<2x358xf32, #tpu.memory_space<vmem>>, vector<2x256xf32>
      %488 = vector.broadcast %486 : f32 to vector<2x256xf32>
      %489 = arith.mulf %488, %487 : vector<2x256xf32>
      %490 = arith.addf %485, %489 : vector<2x256xf32>
      %c74 = arith.constant 74 : index
      %491 = memref.load %arg2[%c74] : memref<98xf32, #tpu.memory_space<smem>>
      %c0_187 = arith.constant 0 : index
      %c52_188 = arith.constant 52 : index
      %492 = vector.load %arg9[%c0_187, %c52_188] : memref<2x358xf32, #tpu.memory_space<vmem>>, vector<2x256xf32>
      %493 = vector.broadcast %491 : f32 to vector<2x256xf32>
      %494 = arith.mulf %493, %492 : vector<2x256xf32>
      %495 = arith.addf %490, %494 : vector<2x256xf32>
      %c81_189 = arith.constant 81 : index
      %496 = memref.load %arg2[%c81_189] : memref<98xf32, #tpu.memory_space<smem>>
      %c0_190 = arith.constant 0 : index
      %c68_191 = arith.constant 68 : index
      %497 = vector.load %arg9[%c0_190, %c68_191] : memref<2x358xf32, #tpu.memory_space<vmem>>, vector<2x256xf32>
      %498 = vector.broadcast %496 : f32 to vector<2x256xf32>
      %499 = arith.mulf %498, %497 : vector<2x256xf32>
      %500 = arith.addf %495, %499 : vector<2x256xf32>
      %c88 = arith.constant 88 : index
      %501 = memref.load %arg2[%c88] : memref<98xf32, #tpu.memory_space<smem>>
      %c0_192 = arith.constant 0 : index
      %c84_193 = arith.constant 84 : index
      %502 = vector.load %arg9[%c0_192, %c84_193] : memref<2x358xf32, #tpu.memory_space<vmem>>, vector<2x256xf32>
      %503 = vector.broadcast %501 : f32 to vector<2x256xf32>
      %504 = arith.mulf %503, %502 : vector<2x256xf32>
      %505 = arith.addf %500, %504 : vector<2x256xf32>
      %c95 = arith.constant 95 : index
      %506 = memref.load %arg2[%c95] : memref<98xf32, #tpu.memory_space<smem>>
      %c0_194 = arith.constant 0 : index
      %c100_195 = arith.constant 100 : index
      %507 = vector.load %arg9[%c0_194, %c100_195] : memref<2x358xf32, #tpu.memory_space<vmem>>, vector<2x256xf32>
      %508 = vector.broadcast %506 : f32 to vector<2x256xf32>
      %509 = arith.mulf %508, %507 : vector<2x256xf32>
      %510 = arith.addf %505, %509 : vector<2x256xf32>
      %511 = vector.extract_strided_slice %22 {offsets = [4, 0, 0], sizes = [1, 1, 256], strides = [1, 1, 1]} : vector<7x1x256xf32> to vector<1x1x256xf32>
      %512 = vector.shape_cast %511 : vector<1x1x256xf32> to vector<1x256xf32>
      %513 = vector.broadcast %512 : vector<1x256xf32> to vector<2x256xf32>
      %514 = arith.mulf %510, %513 : vector<2x256xf32>
      %515 = arith.addf %474, %514 : vector<2x256xf32>
      %cst_196 = arith.constant 0.000000e+00 : f32
      %516 = vector.broadcast %cst_196 : f32 to vector<2x256xf32>
      %c54_197 = arith.constant 54 : index
      %517 = memref.load %arg2[%c54_197] : memref<98xf32, #tpu.memory_space<smem>>
      %c0_198 = arith.constant 0 : index
      %c5_199 = arith.constant 5 : index
      %518 = vector.load %arg9[%c0_198, %c5_199] : memref<2x358xf32, #tpu.memory_space<vmem>>, vector<2x256xf32>
      %519 = vector.broadcast %517 : f32 to vector<2x256xf32>
      %520 = arith.mulf %519, %518 : vector<2x256xf32>
      %521 = arith.addf %516, %520 : vector<2x256xf32>
      %c61 = arith.constant 61 : index
      %522 = memref.load %arg2[%c61] : memref<98xf32, #tpu.memory_space<smem>>
      %c0_200 = arith.constant 0 : index
      %c21_201 = arith.constant 21 : index
      %523 = vector.load %arg9[%c0_200, %c21_201] : memref<2x358xf32, #tpu.memory_space<vmem>>, vector<2x256xf32>
      %524 = vector.broadcast %522 : f32 to vector<2x256xf32>
      %525 = arith.mulf %524, %523 : vector<2x256xf32>
      %526 = arith.addf %521, %525 : vector<2x256xf32>
      %c68_202 = arith.constant 68 : index
      %527 = memref.load %arg2[%c68_202] : memref<98xf32, #tpu.memory_space<smem>>
      %c0_203 = arith.constant 0 : index
      %c37_204 = arith.constant 37 : index
      %528 = vector.load %arg9[%c0_203, %c37_204] : memref<2x358xf32, #tpu.memory_space<vmem>>, vector<2x256xf32>
      %529 = vector.broadcast %527 : f32 to vector<2x256xf32>
      %530 = arith.mulf %529, %528 : vector<2x256xf32>
      %531 = arith.addf %526, %530 : vector<2x256xf32>
      %c75 = arith.constant 75 : index
      %532 = memref.load %arg2[%c75] : memref<98xf32, #tpu.memory_space<smem>>
      %c0_205 = arith.constant 0 : index
      %c53_206 = arith.constant 53 : index
      %533 = vector.load %arg9[%c0_205, %c53_206] : memref<2x358xf32, #tpu.memory_space<vmem>>, vector<2x256xf32>
      %534 = vector.broadcast %532 : f32 to vector<2x256xf32>
      %535 = arith.mulf %534, %533 : vector<2x256xf32>
      %536 = arith.addf %531, %535 : vector<2x256xf32>
      %c82_207 = arith.constant 82 : index
      %537 = memref.load %arg2[%c82_207] : memref<98xf32, #tpu.memory_space<smem>>
      %c0_208 = arith.constant 0 : index
      %c69_209 = arith.constant 69 : index
      %538 = vector.load %arg9[%c0_208, %c69_209] : memref<2x358xf32, #tpu.memory_space<vmem>>, vector<2x256xf32>
      %539 = vector.broadcast %537 : f32 to vector<2x256xf32>
      %540 = arith.mulf %539, %538 : vector<2x256xf32>
      %541 = arith.addf %536, %540 : vector<2x256xf32>
      %c89 = arith.constant 89 : index
      %542 = memref.load %arg2[%c89] : memref<98xf32, #tpu.memory_space<smem>>
      %c0_210 = arith.constant 0 : index
      %c85_211 = arith.constant 85 : index
      %543 = vector.load %arg9[%c0_210, %c85_211] : memref<2x358xf32, #tpu.memory_space<vmem>>, vector<2x256xf32>
      %544 = vector.broadcast %542 : f32 to vector<2x256xf32>
      %545 = arith.mulf %544, %543 : vector<2x256xf32>
      %546 = arith.addf %541, %545 : vector<2x256xf32>
      %c96_212 = arith.constant 96 : index
      %547 = memref.load %arg2[%c96_212] : memref<98xf32, #tpu.memory_space<smem>>
      %c0_213 = arith.constant 0 : index
      %c101_214 = arith.constant 101 : index
      %548 = vector.load %arg9[%c0_213, %c101_214] : memref<2x358xf32, #tpu.memory_space<vmem>>, vector<2x256xf32>
      %549 = vector.broadcast %547 : f32 to vector<2x256xf32>
      %550 = arith.mulf %549, %548 : vector<2x256xf32>
      %551 = arith.addf %546, %550 : vector<2x256xf32>
      %552 = vector.extract_strided_slice %22 {offsets = [5, 0, 0], sizes = [1, 1, 256], strides = [1, 1, 1]} : vector<7x1x256xf32> to vector<1x1x256xf32>
      %553 = vector.shape_cast %552 : vector<1x1x256xf32> to vector<1x256xf32>
      %554 = vector.broadcast %553 : vector<1x256xf32> to vector<2x256xf32>
      %555 = arith.mulf %551, %554 : vector<2x256xf32>
      %556 = arith.addf %515, %555 : vector<2x256xf32>
      %cst_215 = arith.constant 0.000000e+00 : f32
      %557 = vector.broadcast %cst_215 : f32 to vector<2x256xf32>
      %c55 = arith.constant 55 : index
      %558 = memref.load %arg2[%c55] : memref<98xf32, #tpu.memory_space<smem>>
      %c0_216 = arith.constant 0 : index
      %c6_217 = arith.constant 6 : index
      %559 = vector.load %arg9[%c0_216, %c6_217] : memref<2x358xf32, #tpu.memory_space<vmem>>, vector<2x256xf32>
      %560 = vector.broadcast %558 : f32 to vector<2x256xf32>
      %561 = arith.mulf %560, %559 : vector<2x256xf32>
      %562 = arith.addf %557, %561 : vector<2x256xf32>
      %c62 = arith.constant 62 : index
      %563 = memref.load %arg2[%c62] : memref<98xf32, #tpu.memory_space<smem>>
      %c0_218 = arith.constant 0 : index
      %c22_219 = arith.constant 22 : index
      %564 = vector.load %arg9[%c0_218, %c22_219] : memref<2x358xf32, #tpu.memory_space<vmem>>, vector<2x256xf32>
      %565 = vector.broadcast %563 : f32 to vector<2x256xf32>
      %566 = arith.mulf %565, %564 : vector<2x256xf32>
      %567 = arith.addf %562, %566 : vector<2x256xf32>
      %c69_220 = arith.constant 69 : index
      %568 = memref.load %arg2[%c69_220] : memref<98xf32, #tpu.memory_space<smem>>
      %c0_221 = arith.constant 0 : index
      %c38_222 = arith.constant 38 : index
      %569 = vector.load %arg9[%c0_221, %c38_222] : memref<2x358xf32, #tpu.memory_space<vmem>>, vector<2x256xf32>
      %570 = vector.broadcast %568 : f32 to vector<2x256xf32>
      %571 = arith.mulf %570, %569 : vector<2x256xf32>
      %572 = arith.addf %567, %571 : vector<2x256xf32>
      %c76 = arith.constant 76 : index
      %573 = memref.load %arg2[%c76] : memref<98xf32, #tpu.memory_space<smem>>
      %c0_223 = arith.constant 0 : index
      %c54_224 = arith.constant 54 : index
      %574 = vector.load %arg9[%c0_223, %c54_224] : memref<2x358xf32, #tpu.memory_space<vmem>>, vector<2x256xf32>
      %575 = vector.broadcast %573 : f32 to vector<2x256xf32>
      %576 = arith.mulf %575, %574 : vector<2x256xf32>
      %577 = arith.addf %572, %576 : vector<2x256xf32>
      %c83_225 = arith.constant 83 : index
      %578 = memref.load %arg2[%c83_225] : memref<98xf32, #tpu.memory_space<smem>>
      %c0_226 = arith.constant 0 : index
      %c70_227 = arith.constant 70 : index
      %579 = vector.load %arg9[%c0_226, %c70_227] : memref<2x358xf32, #tpu.memory_space<vmem>>, vector<2x256xf32>
      %580 = vector.broadcast %578 : f32 to vector<2x256xf32>
      %581 = arith.mulf %580, %579 : vector<2x256xf32>
      %582 = arith.addf %577, %581 : vector<2x256xf32>
      %c90 = arith.constant 90 : index
      %583 = memref.load %arg2[%c90] : memref<98xf32, #tpu.memory_space<smem>>
      %c0_228 = arith.constant 0 : index
      %c86_229 = arith.constant 86 : index
      %584 = vector.load %arg9[%c0_228, %c86_229] : memref<2x358xf32, #tpu.memory_space<vmem>>, vector<2x256xf32>
      %585 = vector.broadcast %583 : f32 to vector<2x256xf32>
      %586 = arith.mulf %585, %584 : vector<2x256xf32>
      %587 = arith.addf %582, %586 : vector<2x256xf32>
      %c97_230 = arith.constant 97 : index
      %588 = memref.load %arg2[%c97_230] : memref<98xf32, #tpu.memory_space<smem>>
      %c0_231 = arith.constant 0 : index
      %c102_232 = arith.constant 102 : index
      %589 = vector.load %arg9[%c0_231, %c102_232] : memref<2x358xf32, #tpu.memory_space<vmem>>, vector<2x256xf32>
      %590 = vector.broadcast %588 : f32 to vector<2x256xf32>
      %591 = arith.mulf %590, %589 : vector<2x256xf32>
      %592 = arith.addf %587, %591 : vector<2x256xf32>
      %593 = vector.extract_strided_slice %22 {offsets = [6, 0, 0], sizes = [1, 1, 256], strides = [1, 1, 1]} : vector<7x1x256xf32> to vector<1x1x256xf32>
      %594 = vector.shape_cast %593 : vector<1x1x256xf32> to vector<1x256xf32>
      %595 = vector.broadcast %594 : vector<1x256xf32> to vector<2x256xf32>
      %596 = arith.mulf %592, %595 : vector<2x256xf32>
      %597 = arith.addf %556, %596 : vector<2x256xf32>
      %598 = arith.negf %597 : vector<2x256xf32>
      %599 = math.exp %598 : vector<2x256xf32>
      %cst_233 = arith.constant 1.000000e+00 : f32
      %600 = vector.broadcast %cst_233 : f32 to vector<2x256xf32>
      %601 = arith.addf %600, %599 : vector<2x256xf32>
      %602 = arith.divf %600, %601 : vector<2x256xf32>
      %c0_234 = arith.constant 0 : index
      %c0_235 = arith.constant 0 : index
      %603 = vector.load %arg5[%c0_234, %c0_235] : memref<2x256xf32, #tpu.memory_space<vmem>>, vector<2x256xf32>
      tpu.vector_store %arg5[%c0_234, %c0_235], %602 {strides = array<i32>} : memref<2x256xf32, #tpu.memory_space<vmem>>, vector<2x256xf32>,
    } else {
    }
    return
  }
  func.func @transform_0(%arg0: i32, %arg1: i32) -> i32 {
    %c0_i32 = arith.constant 0 : i32
    %c0_i32_0 = arith.constant 0 : i32
    return %c0_i32 : i32
  }
  func.func @transform_1(%arg0: i32, %arg1: i32) -> (i32, i32, i32) {
    %c0_i32 = arith.constant 0 : i32
    %c0_i32_0 = arith.constant 0 : i32
    %c0_i32_1 = arith.constant 0 : i32
    %c0_i32_2 = arith.constant 0 : i32
    return %c0_i32, %c0_i32_0, %c0_i32_1 : i32, i32, i32
  }
  func.func @transform_2(%arg0: i32, %arg1: i32) -> (i32, i32, i32) {
    %c0_i32 = arith.constant 0 : i32
    %c0_i32_0 = arith.constant 0 : i32
    return %arg0, %arg1, %c0_i32 : i32, i32, i32
  }
  func.func @transform_3(%arg0: i32, %arg1: i32) -> (i32, i32) {
    %c0_i32 = arith.constant 0 : i32
    %c0_i32_0 = arith.constant 0 : i32
    return %arg0, %c0_i32 : i32, i32
  }
}

</mosaic_0001>

<llo_original>
// kernel: tpu_custom_call.1
$region0: #{tpu_custom_call.1}
  #allocation0 [shape = 'u32[]', space=smem, size = 0x4, offset = 0x4, fixed_abs, tag = 'smem constant byte address 0x4 - core index']
  #allocation1 [shape = 'u32[144,128]{1,0:T(1,128)}', space=vmem, size = 0x12000, scoped, tag = 'internal scratch']
  #allocation2 [shape = 'f32[2,256]{1,0:T(2,128)}', space=vmem, size = 0x800, scoped, tag = 'scratch operand']
  #allocation3 [shape = 'f32[2,256]{1,0:T(2,128)}', space=vmem, size = 0x800, scoped, tag = 'scratch operand']
  #allocation4 [shape = 'f32[2,358]{1,0:T(2,128)}', space=vmem, size = 0xc00, scoped, tag = 'scratch operand']
  #allocation5 [shape = 'f32[2,358]{1,0:T(2,128)}', space=vmem, size = 0xc00, scoped, tag = 'scratch operand']
  %s0 = inlined_call_operand.hbm [shape: f32[98], index: 0, kind: input, shape index: {}]
  %s1 = inlined_call_operand.hbm [shape: f32[7,1,256], index: 1, kind: input, shape index: {}]
  %s2 = inlined_call_operand.hbm [shape: f32[2,4,256], index: 2, kind: input, shape index: {}]
  %s3 = inlined_call_operand.hbm [shape: f32[2,256], index: 3, kind: output, shape index: {}]
  %s4 = sld [smem:[#allocation0]]
  $region46: #{tpu_custom_call.1} parent=0
    _
  %s6 = ssub.s32 1, %s4
  %s7 = scalar_select 0, %s6, %s4
  $region1: #{tpu_custom_call.1} parent=0
    #allocation6 [shape = 'u8[512]{0}', space=smem, size = 0x200, scoped, tag = 'input window, operand 0, single buffered']
    #allocation7 [shape = 's32[1]{0}', space=sflag, size = 0x4, scoped, tag = 'scoped memory for tpu_custom_call.1']
    #allocation8 [shape = 's32[1]{0}', space=sflag, size = 0x4, scoped, tag = 'scoped memory for tpu_custom_call.1']
    #allocation9 [shape = 's32[1]{0}', space=sflag, size = 0x4, scoped, tag = 'scoped memory for tpu_custom_call.1']
    #allocation10 [shape = 'u8[7168]{0}', space=vmem, size = 0x1c00, scoped, tag = 'input window, operand 1, single buffered']
    #allocation11 [shape = 'u8[8192]{0}', space=vmem, size = 0x2000, scoped, tag = 'input window, operand 2, single buffered']
    #allocation12 [shape = 's32[1]{0}', space=sflag, size = 0x4, scoped, tag = 'scoped memory for tpu_custom_call.1']
    #allocation13 [shape = 'u8[2048]{0}', space=vmem, size = 0x800, scoped, tag = 'output window, operand 0, single buffered']
    %8 = vsyncpa [#allocation9], 0
    %9 = vsyncpa [#allocation7], 0
    %10 = vsyncpa [#allocation12], 0
    %11 = vsyncpa [#allocation8], 0
    // Predicated region
    $region2: #{tpu_custom_call.1} parent=1 // pred_check
      _
    $region3: #{tpu_custom_call.1} parent=1 // pred_check_branch
      %13 = sbr.rel (0) target = $region5
    $region4: #{tpu_custom_call.1} parent=1 // pred_region
      %s15 = ssub.s32 16, 16
      %16 = vsyncadd [#allocation9], %s15
      %19 = dma.hbm_to_smem %s0, 16, [#allocation6], [#allocation9]
    $region5: #{tpu_custom_call.1} parent=1 // pred_fallthru
      _
    // Predicated region
    $region6: #{tpu_custom_call.1} parent=1 // pred_check
      _
    $region7: #{tpu_custom_call.1} parent=1 // pred_check_branch
      %21 = sbr.rel (0) target = $region9
    $region8: #{tpu_custom_call.1} parent=1 // pred_region
      %s23 = ssub.s32 224, 224
      %24 = vsyncadd [#allocation7], %s23
      %s25 = sshll.u32 [#allocation10], 4
      %s26 = int_to_ptr.vmem [resolvable:$true] %s25
      %31 = dma.hbm_to_vmem [thread:$0]  %s1, 224, %s26, [#allocation7], 32, 32, 2
    $region9: #{tpu_custom_call.1} parent=1 // pred_fallthru
      _
    // Predicated region
    $region10: #{tpu_custom_call.1} parent=1 // pred_check
      _
    $region11: #{tpu_custom_call.1} parent=1 // pred_check_branch
      %33 = sbr.rel (0) target = $region13
    $region12: #{tpu_custom_call.1} parent=1 // pred_region
      %s35 = ssub.s32 256, 256
      %36 = vsyncadd [#allocation12], %s35
      %s37 = sshll.u32 [#allocation11], 4
      %s38 = int_to_ptr.vmem [resolvable:$true] %s37
      %43 = dma.hbm_to_vmem [thread:$0]  %s2, 256, %s38, [#allocation12], 128, 128, 8
    $region13: #{tpu_custom_call.1} parent=1 // pred_fallthru
      _
    // Predicated region
    $region14: #{tpu_custom_call.1} parent=1 // pred_check
      _
    $region15: #{tpu_custom_call.1} parent=1 // pred_check_branch
      %45 = sbr.rel (0) target = $region17
    $region16: #{tpu_custom_call.1} parent=1 // pred_region
      %46 = dma.done [#allocation9], 16
    $region17: #{tpu_custom_call.1} parent=1 // pred_fallthru
      _
    // Predicated region
    $region18: #{tpu_custom_call.1} parent=1 // pred_check
      _
    $region19: #{tpu_custom_call.1} parent=1 // pred_check_branch
      %48 = sbr.rel (0) target = $region21
    $region20: #{tpu_custom_call.1} parent=1 // pred_region
      %49 = dma.done [#allocation7], 224
    $region21: #{tpu_custom_call.1} parent=1 // pred_fallthru
      _
    // Predicated region
    $region22: #{tpu_custom_call.1} parent=1 // pred_check
      _
    $region23: #{tpu_custom_call.1} parent=1 // pred_check_branch
      %51 = sbr.rel (0) target = $region25
    $region24: #{tpu_custom_call.1} parent=1 // pred_region
      %52 = dma.done [#allocation12], 256
    $region25: #{tpu_custom_call.1} parent=1 // pred_fallthru
      _
    %53 = sfence
    %v54 = vld [vmem:[#allocation11] sm:$0xff]
    %v55 = vld [vmem:[#allocation11 + $0x8] sm:$0xff]
    %v58 = vcombine.high %v54, %v54
    %v59 = vcombine.high %v55, %v55
    %vm62 = vcmask 1043456
    %v63 = vsel %vm62, %v54, 0.0
    %v64 = vrot.slane %v63, 4
    %v65 = vadd.f32 %v63, %v64
    %v66 = vrot.slane %v65, 2
    %v67 = vadd.f32 %v65, %v66
    %v68 = vrot.slane %v67, 1
    %v69 = vadd.f32 %v67, %v68
    %v70 = vsel %vm62, %v58, 0.0
    %v71 = vrot.slane %v70, 4
    %v72 = vadd.f32 %v70, %v71
    %v73 = vrot.slane %v72, 2
    %v74 = vadd.f32 %v72, %v73
    %v75 = vrot.slane %v74, 1
    %v76 = vadd.f32 %v74, %v75
    %v77 = vsel %vm62, %v55, 0.0
    %v78 = vrot.slane %v77, 4
    %v79 = vadd.f32 %v77, %v78
    %v80 = vrot.slane %v79, 2
    %v81 = vadd.f32 %v79, %v80
    %v82 = vrot.slane %v81, 1
    %v83 = vadd.f32 %v81, %v82
    %v84 = vsel %vm62, %v59, 0.0
    %v85 = vrot.slane %v84, 4
    %v86 = vadd.f32 %v84, %v85
    %v87 = vrot.slane %v86, 2
    %v88 = vadd.f32 %v86, %v87
    %v89 = vrot.slane %v88, 1
    %v90 = vadd.f32 %v88, %v89
    %v91 = vsel %vm62, %v54, -inf
    %v92 = vrot.slane %v91, 4
    %v93 = vmax.f32 %v91, %v92
    %v94 = vrot.slane %v93, 2
    %v95 = vmax.f32 %v93, %v94
    %v96 = vrot.slane %v95, 1
    %v97 = vmax.f32 %v95, %v96
    %v98 = vsel %vm62, %v58, -inf
    %v99 = vrot.slane %v98, 4
    %v100 = vmax.f32 %v98, %v99
    %v101 = vrot.slane %v100, 2
    %v102 = vmax.f32 %v100, %v101
    %v103 = vrot.slane %v102, 1
    %v104 = vmax.f32 %v102, %v103
    %v105 = vsel %vm62, %v55, -inf
    %v106 = vrot.slane %v105, 4
    %v107 = vmax.f32 %v105, %v106
    %v108 = vrot.slane %v107, 2
    %v109 = vmax.f32 %v107, %v108
    %v110 = vrot.slane %v109, 1
    %v111 = vmax.f32 %v109, %v110
    %v112 = vsel %vm62, %v59, -inf
    %v113 = vrot.slane %v112, 4
    %v114 = vmax.f32 %v112, %v113
    %v115 = vrot.slane %v114, 2
    %v116 = vmax.f32 %v114, %v115
    %v117 = vrot.slane %v116, 1
    %v118 = vmax.f32 %v116, %v117
    %p119 = scmp.eq.s32.totalorder 0, 0
    // Predicated region
    $region26: #{tpu_custom_call.1} parent=1 // pred_check
      %p120 = pneg %p119
    $region27: #{tpu_custom_call.1} parent=1 // pred_check_branch
      %122 = sbr.rel (%p120) target = $region29
    $region28: #{tpu_custom_call.1} parent=1 // pred_region
      %v127 = vcombine.low %v69, %v76
      %v129 = vunpack.c.l.s4 1983009808
      %v130 = vunpack.c.0.s8 %v129
      %v131 = vlaneseq
      %v132 = vshrl.u32 %v131, 7
      %v133 = vsub.s32 %v130, %v132
      %v134 = vrot.slane %v127, %v133
      %v135 = vcombine.low %v83, %v90
      %v137 = vunpack.c.l.s4 1983009808
      %v138 = vunpack.c.0.s8 %v137
      %v139 = vlaneseq
      %v140 = vshrl.u32 %v139, 7
      %v141 = vsub.s32 %v138, %v140
      %v142 = vrot.slane %v135, %v141
      %vm143 = vcmask 1044484
      %v144 = vsel %vm143, %v134, %v134
      %vm145 = vcmask 1046534
      %v146 = vsel %vm145, %v134, %v144
      %v147 = vrot.slane %v142, 7
      %vm148 = vcmask 1041409
      %v149 = vsel %vm148, %v147, %v146
      %vm150 = vcmask 1043459
      %v151 = vsel %vm150, %v147, %v149
      %vm152 = vcmask 1045509
      %v153 = vsel %vm152, %v147, %v151
      %vm154 = vcmask 1047559
      %v155 = vsel %vm154, %v147, %v153
      %157 = vst [vmem:[#allocation2] sm:$0xf] %v155
      %v162 = vcombine.low %v97, %v104
      %v164 = vunpack.c.l.s4 1983009808
      %v165 = vunpack.c.0.s8 %v164
      %v166 = vlaneseq
      %v167 = vshrl.u32 %v166, 7
      %v168 = vsub.s32 %v165, %v167
      %v169 = vrot.slane %v162, %v168
      %v170 = vcombine.low %v111, %v118
      %v172 = vunpack.c.l.s4 1983009808
      %v173 = vunpack.c.0.s8 %v172
      %v174 = vlaneseq
      %v175 = vshrl.u32 %v174, 7
      %v176 = vsub.s32 %v173, %v175
      %v177 = vrot.slane %v170, %v176
      %v178 = vsel %vm143, %v169, %v169
      %v179 = vsel %vm145, %v169, %v178
      %v180 = vrot.slane %v177, 7
      %v181 = vsel %vm148, %v180, %v179
      %v182 = vsel %vm150, %v180, %v181
      %v183 = vsel %vm152, %v180, %v182
      %v184 = vsel %vm154, %v180, %v183
      %186 = vst [vmem:[#allocation3] sm:$0xf] %v184
    $region29: #{tpu_custom_call.1} parent=1 // pred_fallthru
      _
    %p187 = scmp.ne.s32.totalorder 0, 0
    // Predicated region
    $region30: #{tpu_custom_call.1} parent=1 // pred_check
      %p188 = pneg %p187
    $region31: #{tpu_custom_call.1} parent=1 // pred_check_branch
      %190 = sbr.rel (%p188) target = $region33
    $region32: #{tpu_custom_call.1} parent=1 // pred_region
      %v191 = vld [vmem:[#allocation2] sm:$0xf]
      %v196 = vcombine.low %v69, %v76
      %v198 = vunpack.c.l.s4 1983009808
      %v199 = vunpack.c.0.s8 %v198
      %v200 = vlaneseq
      %v201 = vshrl.u32 %v200, 7
      %v202 = vsub.s32 %v199, %v201
      %v203 = vrot.slane %v196, %v202
      %v204 = vcombine.low %v83, %v90
      %v206 = vunpack.c.l.s4 1983009808
      %v207 = vunpack.c.0.s8 %v206
      %v208 = vlaneseq
      %v209 = vshrl.u32 %v208, 7
      %v210 = vsub.s32 %v207, %v209
      %v211 = vrot.slane %v204, %v210
      %vm212 = vcmask 1044484
      %v213 = vsel %vm212, %v203, %v203
      %vm214 = vcmask 1046534
      %v215 = vsel %vm214, %v203, %v213
      %v216 = vrot.slane %v211, 7
      %vm217 = vcmask 1041409
      %v218 = vsel %vm217, %v216, %v215
      %vm219 = vcmask 1043459
      %v220 = vsel %vm219, %v216, %v218
      %vm221 = vcmask 1045509
      %v222 = vsel %vm221, %v216, %v220
      %vm223 = vcmask 1047559
      %v224 = vsel %vm223, %v216, %v222
      %v226 = vadd.f32 %v191, %v224
      %227 = vst [vmem:[#allocation2] sm:$0xf] %v226
      %v228 = vld [vmem:[#allocation3] sm:$0xf]
      %v233 = vcombine.low %v97, %v104
      %v235 = vunpack.c.l.s4 1983009808
      %v236 = vunpack.c.0.s8 %v235
      %v237 = vlaneseq
      %v238 = vshrl.u32 %v237, 7
      %v239 = vsub.s32 %v236, %v238
      %v240 = vrot.slane %v233, %v239
      %v241 = vcombine.low %v111, %v118
      %v243 = vunpack.c.l.s4 1983009808
      %v244 = vunpack.c.0.s8 %v243
      %v245 = vlaneseq
      %v246 = vshrl.u32 %v245, 7
      %v247 = vsub.s32 %v244, %v246
      %v248 = vrot.slane %v241, %v247
      %v249 = vsel %vm212, %v240, %v240
      %v250 = vsel %vm214, %v240, %v249
      %v251 = vrot.slane %v248, 7
      %v252 = vsel %vm217, %v251, %v250
      %v253 = vsel %vm219, %v251, %v252
      %v254 = vsel %vm221, %v251, %v253
      %v255 = vsel %vm223, %v251, %v254
      %v257 = vmax.f32 %v228, %v255
      %258 = vst [vmem:[#allocation3] sm:$0xf] %v257
    $region33: #{tpu_custom_call.1} parent=1 // pred_fallthru
      _
    // Predicated region
    $region34: #{tpu_custom_call.1} parent=1 // pred_check
      %p259 = pneg %p119
    $region35: #{tpu_custom_call.1} parent=1 // pred_check_branch
      %261 = sbr.rel (%p259) target = $region37
    $region36: #{tpu_custom_call.1} parent=1 // pred_region
      %v262 = vld [vmem:[#allocation2] sm:$0xf]
      %v263 = vmul.f32 %v262, 0.25
      %v264 = vld [vmem:[#allocation3] sm:$0xf]
      %vm265 = vcmask 1041408
      %vm266 = vcmask 1043458
      %vm267 = vmor %vm266, %vm265
      %vm268 = vcmask 832516
      %vm269 = vmor %vm268, %vm267
      %270 = vst.msk [vmem:[#allocation4] sm:$0x3f] %vm269, 0.0
      %271 = vst.msk [vmem:[#allocation5] sm:$0x3f] %vm269, 0.0
      %273 = vrot.lane.b32.xlu0 %v263, 51
      %v274 = vpop.permute.xlu0 %273
      %v275 = vrot.slane %v274, 6
      %vm276 = vcmask 416768
      %v277 = vsel %vm276, %v275, %v274
      %vm279 = vcmask 1041816
      %vm280 = vmor %vm266, %vm279
      %vm281 = vcmask 414724
      %vm282 = vmor %vm281, %vm280
      %283 = vst.msk [vmem:[#allocation4] sm:$0x3f] %vm282, %v277
      %285 = vrot.lane.b32.xlu0 %v264, 51
      %v286 = vpop.permute.xlu0 %285
      %v287 = vrot.slane %v286, 6
      %v288 = vsel %vm276, %v287, %v286
      %290 = vst.msk [vmem:[#allocation5] sm:$0x3f] %vm282, %v288
      %v291 = vld [vmem:[#allocation10] sm:$0x3]
      %v292 = vld [vmem:[#allocation10 + $0x2] sm:$0x3]
      %v293 = vld [vmem:[#allocation10 + $0x4] sm:$0x3]
      %v294 = vld [vmem:[#allocation10 + $0x6] sm:$0x3]
      %v295 = vld [vmem:[#allocation10 + $0x8] sm:$0x3]
      %v296 = vld [vmem:[#allocation10 + $0xa] sm:$0x3]
      %v297 = vld [vmem:[#allocation10 + $0xc] sm:$0x3]
      %s298 = sld [smem:[#allocation6]]
      %v299 = vld [vmem:[#allocation4] sm:$0xf]
      %v300 = vstv %s298
      %v301 = vmul.f32 %v300, %v299
      %v302 = vadd.f32 %v301, 0.0
      %s303 = sld [smem:[#allocation6 + $0x7]]
      %v304 = vld [vmem:[#allocation4] sm:$0x3f]
      %v305 = vstv %s303
      %v306 = vmul.f32 %v305, %v304
      %308 = vrot.lane.b32.xlu0 %v306, 112
      %v309 = vpop.permute.xlu0 %308
      %v310 = vrot.slane %v309, 2
      %vm311 = vcmask 916480
      %v312 = vsel %vm311, %v309, %v310
      %v314 = vadd.f32 %v302, %v312
      %s315 = sld [smem:[#allocation6 + $0xe]]
      %v316 = vstv %s315
      %v317 = vmul.f32 %v316, %v304
      %319 = vrot.lane.b32.xlu0 %v317, 96
      %v320 = vpop.permute.xlu0 %319
      %v321 = vrot.slane %v320, 2
      %vm322 = vcmask 785408
      %v323 = vsel %vm322, %v320, %v321
      %v325 = vadd.f32 %v314, %v323
      %s326 = sld [smem:[#allocation6 + $0x15]]
      %v327 = vstv %s326
      %v328 = vmul.f32 %v327, %v304
      %330 = vrot.lane.b32.xlu0 %v328, 80
      %v331 = vpop.permute.xlu0 %330
      %v332 = vrot.slane %v331, 2
      %vm333 = vcmask 654336
      %v334 = vsel %vm333, %v331, %v332
      %v336 = vadd.f32 %v325, %v334
      %s337 = sld [smem:[#allocation6 + $0x1c]]
      %v338 = vstv %s337
      %v339 = vmul.f32 %v338, %v304
      %341 = vrot.lane.b32.xlu0 %v339, 64
      %v342 = vpop.permute.xlu0 %341
      %v343 = vrot.slane %v342, 2
      %vm344 = vcmask 523264
      %v345 = vsel %vm344, %v342, %v343
      %v347 = vadd.f32 %v336, %v345
      %s348 = sld [smem:[#allocation6 + $0x23]]
      %v349 = vstv %s348
      %v350 = vmul.f32 %v349, %v304
      %352 = vrot.lane.b32.xlu0 %v350, 48
      %v353 = vpop.permute.xlu0 %352
      %v354 = vrot.slane %v353, 2
      %vm355 = vcmask 392192
      %v356 = vsel %vm355, %v353, %v354
      %v358 = vadd.f32 %v347, %v356
      %s359 = sld [smem:[#allocation6 + $0x2a]]
      %v360 = vstv %s359
      %v361 = vmul.f32 %v360, %v304
      %363 = vrot.lane.b32.xlu0 %v361, 32
      %v364 = vpop.permute.xlu0 %363
      %v365 = vrot.slane %v364, 2
      %vm366 = vcmask 261120
      %v367 = vsel %vm366, %v364, %v365
      %v369 = vadd.f32 %v358, %v367
      %v371 = vlaneseq
      %v372 = vshrl.u32 %v371, 7
      %v373 = vsub.s32 0, %v372
      %v374 = vrot.slane %v291, %v373
      %v375 = vlaneseq
      %v376 = vshrl.u32 %v375, 7
      %v377 = vsub.s32 1, %v376
      %v378 = vrot.slane %v291, %v377
      %v379 = vcombine.low %v374, %v378
      %v381 = vunpack.c.l.s4 1983009808
      %v382 = vunpack.c.0.s8 %v381
      %v383 = vlaneseq
      %v384 = vshrl.u32 %v383, 7
      %v385 = vsub.s32 %v382, %v384
      %v386 = vrot.slane %v379, %v385
      %v388 = vmul.f32 %v369, %v386
      %v389 = vadd.f32 %v388, 0.0
      %s390 = sld [smem:[#allocation6 + $0x1]]
      %v391 = vld [vmem:[#allocation4] sm:$0x3f]
      %v392 = vstv %s390
      %v393 = vmul.f32 %v392, %v391
      %v394 = vadd.f32 %v393, 0.0
      %s395 = sld [smem:[#allocation6 + $0x8]]
      %v396 = vstv %s395
      %v397 = vmul.f32 %v396, %v391
      %399 = vrot.lane.b32.xlu0 %v397, 112
      %v400 = vpop.permute.xlu0 %399
      %v401 = vrot.slane %v400, 2
      %v402 = vsel %vm311, %v400, %v401
      %v404 = vadd.f32 %v394, %v402
      %s405 = sld [smem:[#allocation6 + $0xf]]
      %v406 = vstv %s405
      %v407 = vmul.f32 %v406, %v391
      %409 = vrot.lane.b32.xlu0 %v407, 96
      %v410 = vpop.permute.xlu0 %409
      %v411 = vrot.slane %v410, 2
      %v412 = vsel %vm322, %v410, %v411
      %v414 = vadd.f32 %v404, %v412
      %s415 = sld [smem:[#allocation6 + $0x16]]
      %v416 = vstv %s415
      %v417 = vmul.f32 %v416, %v391
      %419 = vrot.lane.b32.xlu0 %v417, 80
      %v420 = vpop.permute.xlu0 %419
      %v421 = vrot.slane %v420, 2
      %v422 = vsel %vm333, %v420, %v421
      %v424 = vadd.f32 %v414, %v422
      %s425 = sld [smem:[#allocation6 + $0x1d]]
      %v426 = vstv %s425
      %v427 = vmul.f32 %v426, %v391
      %429 = vrot.lane.b32.xlu0 %v427, 64
      %v430 = vpop.permute.xlu0 %429
      %v431 = vrot.slane %v430, 2
      %v432 = vsel %vm344, %v430, %v431
      %v434 = vadd.f32 %v424, %v432
      %s435 = sld [smem:[#allocation6 + $0x24]]
      %v436 = vstv %s435
      %v437 = vmul.f32 %v436, %v391
      %439 = vrot.lane.b32.xlu0 %v437, 48
      %v440 = vpop.permute.xlu0 %439
      %v441 = vrot.slane %v440, 2
      %v442 = vsel %vm355, %v440, %v441
      %v444 = vadd.f32 %v434, %v442
      %s445 = sld [smem:[#allocation6 + $0x2b]]
      %v446 = vstv %s445
      %v447 = vmul.f32 %v446, %v391
      %449 = vrot.lane.b32.xlu0 %v447, 32
      %v450 = vpop.permute.xlu0 %449
      %v451 = vrot.slane %v450, 2
      %v452 = vsel %vm366, %v450, %v451
      %v454 = vadd.f32 %v444, %v452
      %v456 = vlaneseq
      %v457 = vshrl.u32 %v456, 7
      %v458 = vsub.s32 0, %v457
      %v459 = vrot.slane %v292, %v458
      %v460 = vlaneseq
      %v461 = vshrl.u32 %v460, 7
      %v462 = vsub.s32 1, %v461
      %v463 = vrot.slane %v292, %v462
      %v464 = vcombine.low %v459, %v463
      %v466 = vunpack.c.l.s4 1983009808
      %v467 = vunpack.c.0.s8 %v466
      %v468 = vlaneseq
      %v469 = vshrl.u32 %v468, 7
      %v470 = vsub.s32 %v467, %v469
      %v471 = vrot.slane %v464, %v470
      %472 = vrot.lane.b32.xlu0 %v471, 1
      %v473 = vpop.permute.xlu0 %472
      %v474 = vrot.slane %v473, 6
      %vm475 = vcmask 7168
      %v476 = vsel %vm475, %v474, %v473
      %v478 = vmul.f32 %v454, %v476
      %480 = vrot.lane.b32.xlu0 %v478, 127
      %v481 = vpop.permute.xlu0 %480
      %v482 = vrot.slane %v481, 2
      %vm483 = vcmask 1039360
      %v484 = vsel %vm483, %v481, %v482
      %v486 = vadd.f32 %v389, %v484
      %s487 = sld [smem:[#allocation6 + $0x2]]
      %v488 = vld [vmem:[#allocation4] sm:$0x3f]
      %v489 = vstv %s487
      %v490 = vmul.f32 %v489, %v488
      %v491 = vadd.f32 %v490, 0.0
      %s492 = sld [smem:[#allocation6 + $0x9]]
      %v493 = vstv %s492
      %v494 = vmul.f32 %v493, %v488
      %496 = vrot.lane.b32.xlu0 %v494, 112
      %v497 = vpop.permute.xlu0 %496
      %v498 = vrot.slane %v497, 2
      %v499 = vsel %vm311, %v497, %v498
      %v501 = vadd.f32 %v491, %v499
      %s502 = sld [smem:[#allocation6 + $0x10]]
      %v503 = vstv %s502
      %v504 = vmul.f32 %v503, %v488
      %506 = vrot.lane.b32.xlu0 %v504, 96
      %v507 = vpop.permute.xlu0 %506
      %v508 = vrot.slane %v507, 2
      %v509 = vsel %vm322, %v507, %v508
      %v511 = vadd.f32 %v501, %v509
      %s512 = sld [smem:[#allocation6 + $0x17]]
      %v513 = vstv %s512
      %v514 = vmul.f32 %v513, %v488
      %516 = vrot.lane.b32.xlu0 %v514, 80
      %v517 = vpop.permute.xlu0 %516
      %v518 = vrot.slane %v517, 2
      %v519 = vsel %vm333, %v517, %v518
      %v521 = vadd.f32 %v511, %v519
      %s522 = sld [smem:[#allocation6 + $0x1e]]
      %v523 = vstv %s522
      %v524 = vmul.f32 %v523, %v488
      %526 = vrot.lane.b32.xlu0 %v524, 64
      %v527 = vpop.permute.xlu0 %526
      %v528 = vrot.slane %v527, 2
      %v529 = vsel %vm344, %v527, %v528
      %v531 = vadd.f32 %v521, %v529
      %s532 = sld [smem:[#allocation6 + $0x25]]
      %v533 = vstv %s532
      %v534 = vmul.f32 %v533, %v488
      %536 = vrot.lane.b32.xlu0 %v534, 48
      %v537 = vpop.permute.xlu0 %536
      %v538 = vrot.slane %v537, 2
      %v539 = vsel %vm355, %v537, %v538
      %v541 = vadd.f32 %v531, %v539
      %s542 = sld [smem:[#allocation6 + $0x2c]]
      %v543 = vstv %s542
      %v544 = vmul.f32 %v543, %v488
      %546 = vrot.lane.b32.xlu0 %v544, 32
      %v547 = vpop.permute.xlu0 %546
      %v548 = vrot.slane %v547, 2
      %v549 = vsel %vm366, %v547, %v548
      %v551 = vadd.f32 %v541, %v549
      %v553 = vlaneseq
      %v554 = vshrl.u32 %v553, 7
      %v555 = vsub.s32 0, %v554
      %v556 = vrot.slane %v293, %v555
      %v557 = vlaneseq
      %v558 = vshrl.u32 %v557, 7
      %v559 = vsub.s32 1, %v558
      %v560 = vrot.slane %v293, %v559
      %v561 = vcombine.low %v556, %v560
      %v563 = vunpack.c.l.s4 1983009808
      %v564 = vunpack.c.0.s8 %v563
      %v565 = vlaneseq
      %v566 = vshrl.u32 %v565, 7
      %v567 = vsub.s32 %v564, %v566
      %v568 = vrot.slane %v561, %v567
      %569 = vrot.lane.b32.xlu0 %v568, 2
      %v570 = vpop.permute.xlu0 %569
      %v571 = vrot.slane %v570, 6
      %vm572 = vcmask 15360
      %v573 = vsel %vm572, %v571, %v570
      %v575 = vmul.f32 %v551, %v573
      %577 = vrot.lane.b32.xlu0 %v575, 126
      %v578 = vpop.permute.xlu0 %577
      %v579 = vrot.slane %v578, 2
      %vm580 = vcmask 1031168
      %v581 = vsel %vm580, %v578, %v579
      %v583 = vadd.f32 %v486, %v581
      %s584 = sld [smem:[#allocation6 + $0x3]]
      %v585 = vld [vmem:[#allocation4] sm:$0x3f]
      %v586 = vstv %s584
      %v587 = vmul.f32 %v586, %v585
      %v588 = vadd.f32 %v587, 0.0
      %s589 = sld [smem:[#allocation6 + $0xa]]
      %v590 = vstv %s589
      %v591 = vmul.f32 %v590, %v585
      %593 = vrot.lane.b32.xlu0 %v591, 112
      %v594 = vpop.permute.xlu0 %593
      %v595 = vrot.slane %v594, 2
      %v596 = vsel %vm311, %v594, %v595
      %v598 = vadd.f32 %v588, %v596
      %s599 = sld [smem:[#allocation6 + $0x11]]
      %v600 = vstv %s599
      %v601 = vmul.f32 %v600, %v585
      %603 = vrot.lane.b32.xlu0 %v601, 96
      %v604 = vpop.permute.xlu0 %603
      %v605 = vrot.slane %v604, 2
      %v606 = vsel %vm322, %v604, %v605
      %v608 = vadd.f32 %v598, %v606
      %s609 = sld [smem:[#allocation6 + $0x18]]
      %v610 = vstv %s609
      %v611 = vmul.f32 %v610, %v585
      %613 = vrot.lane.b32.xlu0 %v611, 80
      %v614 = vpop.permute.xlu0 %613
      %v615 = vrot.slane %v614, 2
      %v616 = vsel %vm333, %v614, %v615
      %v618 = vadd.f32 %v608, %v616
      %s619 = sld [smem:[#allocation6 + $0x1f]]
      %v620 = vstv %s619
      %v621 = vmul.f32 %v620, %v585
      %623 = vrot.lane.b32.xlu0 %v621, 64
      %v624 = vpop.permute.xlu0 %623
      %v625 = vrot.slane %v624, 2
      %v626 = vsel %vm344, %v624, %v625
      %v628 = vadd.f32 %v618, %v626
      %s629 = sld [smem:[#allocation6 + $0x26]]
      %v630 = vstv %s629
      %v631 = vmul.f32 %v630, %v585
      %633 = vrot.lane.b32.xlu0 %v631, 48
      %v634 = vpop.permute.xlu0 %633
      %v635 = vrot.slane %v634, 2
      %v636 = vsel %vm355, %v634, %v635
      %v638 = vadd.f32 %v628, %v636
      %s639 = sld [smem:[#allocation6 + $0x2d]]
      %v640 = vstv %s639
      %v641 = vmul.f32 %v640, %v585
      %643 = vrot.lane.b32.xlu0 %v641, 32
      %v644 = vpop.permute.xlu0 %643
      %v645 = vrot.slane %v644, 2
      %v646 = vsel %vm366, %v644, %v645
      %v648 = vadd.f32 %v638, %v646
      %v650 = vlaneseq
      %v651 = vshrl.u32 %v650, 7
      %v652 = vsub.s32 0, %v651
      %v653 = vrot.slane %v294, %v652
      %v654 = vlaneseq
      %v655 = vshrl.u32 %v654, 7
      %v656 = vsub.s32 1, %v655
      %v657 = vrot.slane %v294, %v656
      %v658 = vcombine.low %v653, %v657
      %v660 = vunpack.c.l.s4 1983009808
      %v661 = vunpack.c.0.s8 %v660
      %v662 = vlaneseq
      %v663 = vshrl.u32 %v662, 7
      %v664 = vsub.s32 %v661, %v663
      %v665 = vrot.slane %v658, %v664
      %666 = vrot.lane.b32.xlu0 %v665, 3
      %v667 = vpop.permute.xlu0 %666
      %v668 = vrot.slane %v667, 6
      %vm669 = vcmask 23552
      %v670 = vsel %vm669, %v668, %v667
      %v672 = vmul.f32 %v648, %v670
      %674 = vrot.lane.b32.xlu0 %v672, 125
      %v675 = vpop.permute.xlu0 %674
      %v676 = vrot.slane %v675, 2
      %vm677 = vcmask 1022976
      %v678 = vsel %vm677, %v675, %v676
      %v680 = vadd.f32 %v583, %v678
      %s681 = sld [smem:[#allocation6 + $0x4]]
      %v682 = vld [vmem:[#allocation4] sm:$0x3f]
      %v683 = vstv %s681
      %v684 = vmul.f32 %v683, %v682
      %v685 = vadd.f32 %v684, 0.0
      %s686 = sld [smem:[#allocation6 + $0xb]]
      %v687 = vstv %s686
      %v688 = vmul.f32 %v687, %v682
      %690 = vrot.lane.b32.xlu0 %v688, 112
      %v691 = vpop.permute.xlu0 %690
      %v692 = vrot.slane %v691, 2
      %v693 = vsel %vm311, %v691, %v692
      %v695 = vadd.f32 %v685, %v693
      %s696 = sld [smem:[#allocation6 + $0x12]]
      %v697 = vstv %s696
      %v698 = vmul.f32 %v697, %v682
      %700 = vrot.lane.b32.xlu0 %v698, 96
      %v701 = vpop.permute.xlu0 %700
      %v702 = vrot.slane %v701, 2
      %v703 = vsel %vm322, %v701, %v702
      %v705 = vadd.f32 %v695, %v703
      %s706 = sld [smem:[#allocation6 + $0x19]]
      %v707 = vstv %s706
      %v708 = vmul.f32 %v707, %v682
      %710 = vrot.lane.b32.xlu0 %v708, 80
      %v711 = vpop.permute.xlu0 %710
      %v712 = vrot.slane %v711, 2
      %v713 = vsel %vm333, %v711, %v712
      %v715 = vadd.f32 %v705, %v713
      %s716 = sld [smem:[#allocation6 + $0x20]]
      %v717 = vstv %s716
      %v718 = vmul.f32 %v717, %v682
      %720 = vrot.lane.b32.xlu0 %v718, 64
      %v721 = vpop.permute.xlu0 %720
      %v722 = vrot.slane %v721, 2
      %v723 = vsel %vm344, %v721, %v722
      %v725 = vadd.f32 %v715, %v723
      %s726 = sld [smem:[#allocation6 + $0x27]]
      %v727 = vstv %s726
      %v728 = vmul.f32 %v727, %v682
      %730 = vrot.lane.b32.xlu0 %v728, 48
      %v731 = vpop.permute.xlu0 %730
      %v732 = vrot.slane %v731, 2
      %v733 = vsel %vm355, %v731, %v732
      %v735 = vadd.f32 %v725, %v733
      %s736 = sld [smem:[#allocation6 + $0x2e]]
      %v737 = vstv %s736
      %v738 = vmul.f32 %v737, %v682
      %740 = vrot.lane.b32.xlu0 %v738, 32
      %v741 = vpop.permute.xlu0 %740
      %v742 = vrot.slane %v741, 2
      %v743 = vsel %vm366, %v741, %v742
      %v745 = vadd.f32 %v735, %v743
      %v747 = vlaneseq
      %v748 = vshrl.u32 %v747, 7
      %v749 = vsub.s32 0, %v748
      %v750 = vrot.slane %v295, %v749
      %v751 = vlaneseq
      %v752 = vshrl.u32 %v751, 7
      %v753 = vsub.s32 1, %v752
      %v754 = vrot.slane %v295, %v753
      %v755 = vcombine.low %v750, %v754
      %v757 = vunpack.c.l.s4 1983009808
      %v758 = vunpack.c.0.s8 %v757
      %v759 = vlaneseq
      %v760 = vshrl.u32 %v759, 7
      %v761 = vsub.s32 %v758, %v760
      %v762 = vrot.slane %v755, %v761
      %763 = vrot.lane.b32.xlu0 %v762, 4
      %v764 = vpop.permute.xlu0 %763
      %v765 = vrot.slane %v764, 6
      %vm766 = vcmask 31744
      %v767 = vsel %vm766, %v765, %v764
      %v769 = vmul.f32 %v745, %v767
      %771 = vrot.lane.b32.xlu0 %v769, 124
      %v772 = vpop.permute.xlu0 %771
      %v773 = vrot.slane %v772, 2
      %vm774 = vcmask 1014784
      %v775 = vsel %vm774, %v772, %v773
      %v777 = vadd.f32 %v680, %v775
      %s778 = sld [smem:[#allocation6 + $0x5]]
      %v779 = vld [vmem:[#allocation4] sm:$0x3f]
      %v780 = vstv %s778
      %v781 = vmul.f32 %v780, %v779
      %v782 = vadd.f32 %v781, 0.0
      %s783 = sld [smem:[#allocation6 + $0xc]]
      %v784 = vstv %s783
      %v785 = vmul.f32 %v784, %v779
      %787 = vrot.lane.b32.xlu0 %v785, 112
      %v788 = vpop.permute.xlu0 %787
      %v789 = vrot.slane %v788, 2
      %v790 = vsel %vm311, %v788, %v789
      %v792 = vadd.f32 %v782, %v790
      %s793 = sld [smem:[#allocation6 + $0x13]]
      %v794 = vstv %s793
      %v795 = vmul.f32 %v794, %v779
      %797 = vrot.lane.b32.xlu0 %v795, 96
      %v798 = vpop.permute.xlu0 %797
      %v799 = vrot.slane %v798, 2
      %v800 = vsel %vm322, %v798, %v799
      %v802 = vadd.f32 %v792, %v800
      %s803 = sld [smem:[#allocation6 + $0x1a]]
      %v804 = vstv %s803
      %v805 = vmul.f32 %v804, %v779
      %807 = vrot.lane.b32.xlu0 %v805, 80
      %v808 = vpop.permute.xlu0 %807
      %v809 = vrot.slane %v808, 2
      %v810 = vsel %vm333, %v808, %v809
      %v812 = vadd.f32 %v802, %v810
      %s813 = sld [smem:[#allocation6 + $0x21]]
      %v814 = vstv %s813
      %v815 = vmul.f32 %v814, %v779
      %817 = vrot.lane.b32.xlu0 %v815, 64
      %v818 = vpop.permute.xlu0 %817
      %v819 = vrot.slane %v818, 2
      %v820 = vsel %vm344, %v818, %v819
      %v822 = vadd.f32 %v812, %v820
      %s823 = sld [smem:[#allocation6 + $0x28]]
      %v824 = vstv %s823
      %v825 = vmul.f32 %v824, %v779
      %827 = vrot.lane.b32.xlu0 %v825, 48
      %v828 = vpop.permute.xlu0 %827
      %v829 = vrot.slane %v828, 2
      %v830 = vsel %vm355, %v828, %v829
      %v832 = vadd.f32 %v822, %v830
      %s833 = sld [smem:[#allocation6 + $0x2f]]
      %v834 = vstv %s833
      %v835 = vmul.f32 %v834, %v779
      %837 = vrot.lane.b32.xlu0 %v835, 32
      %v838 = vpop.permute.xlu0 %837
      %v839 = vrot.slane %v838, 2
      %v840 = vsel %vm366, %v838, %v839
      %v842 = vadd.f32 %v832, %v840
      %v844 = vlaneseq
      %v845 = vshrl.u32 %v844, 7
      %v846 = vsub.s32 0, %v845
      %v847 = vrot.slane %v296, %v846
      %v848 = vlaneseq
      %v849 = vshrl.u32 %v848, 7
      %v850 = vsub.s32 1, %v849
      %v851 = vrot.slane %v296, %v850
      %v852 = vcombine.low %v847, %v851
      %v854 = vunpack.c.l.s4 1983009808
      %v855 = vunpack.c.0.s8 %v854
      %v856 = vlaneseq
      %v857 = vshrl.u32 %v856, 7
      %v858 = vsub.s32 %v855, %v857
      %v859 = vrot.slane %v852, %v858
      %860 = vrot.lane.b32.xlu0 %v859, 5
      %v861 = vpop.permute.xlu0 %860
      %v862 = vrot.slane %v861, 6
      %vm863 = vcmask 39936
      %v864 = vsel %vm863, %v862, %v861
      %v866 = vmul.f32 %v842, %v864
      %868 = vrot.lane.b32.xlu0 %v866, 123
      %v869 = vpop.permute.xlu0 %868
      %v870 = vrot.slane %v869, 2
      %vm871 = vcmask 1006592
      %v872 = vsel %vm871, %v869, %v870
      %v874 = vadd.f32 %v777, %v872
      %s875 = sld [smem:[#allocation6 + $0x6]]
      %v876 = vld [vmem:[#allocation4] sm:$0x3f]
      %v877 = vstv %s875
      %v878 = vmul.f32 %v877, %v876
      %v879 = vadd.f32 %v878, 0.0
      %s880 = sld [smem:[#allocation6 + $0xd]]
      %v881 = vstv %s880
      %v882 = vmul.f32 %v881, %v876
      %884 = vrot.lane.b32.xlu0 %v882, 112
      %v885 = vpop.permute.xlu0 %884
      %v886 = vrot.slane %v885, 2
      %v887 = vsel %vm311, %v885, %v886
      %v889 = vadd.f32 %v879, %v887
      %s890 = sld [smem:[#allocation6 + $0x14]]
      %v891 = vstv %s890
      %v892 = vmul.f32 %v891, %v876
      %894 = vrot.lane.b32.xlu0 %v892, 96
      %v895 = vpop.permute.xlu0 %894
      %v896 = vrot.slane %v895, 2
      %v897 = vsel %vm322, %v895, %v896
      %v899 = vadd.f32 %v889, %v897
      %s900 = sld [smem:[#allocation6 + $0x1b]]
      %v901 = vstv %s900
      %v902 = vmul.f32 %v901, %v876
      %904 = vrot.lane.b32.xlu0 %v902, 80
      %v905 = vpop.permute.xlu0 %904
      %v906 = vrot.slane %v905, 2
      %v907 = vsel %vm333, %v905, %v906
      %v909 = vadd.f32 %v899, %v907
      %s910 = sld [smem:[#allocation6 + $0x22]]
      %v911 = vstv %s910
      %v912 = vmul.f32 %v911, %v876
      %914 = vrot.lane.b32.xlu0 %v912, 64
      %v915 = vpop.permute.xlu0 %914
      %v916 = vrot.slane %v915, 2
      %v917 = vsel %vm344, %v915, %v916
      %v919 = vadd.f32 %v909, %v917
      %s920 = sld [smem:[#allocation6 + $0x29]]
      %v921 = vstv %s920
      %v922 = vmul.f32 %v921, %v876
      %924 = vrot.lane.b32.xlu0 %v922, 48
      %v925 = vpop.permute.xlu0 %924
      %v926 = vrot.slane %v925, 2
      %v927 = vsel %vm355, %v925, %v926
      %v929 = vadd.f32 %v919, %v927
      %s930 = sld [smem:[#allocation6 + $0x30]]
      %v931 = vstv %s930
      %v932 = vmul.f32 %v931, %v876
      %934 = vrot.lane.b32.xlu0 %v932, 32
      %v935 = vpop.permute.xlu0 %934
      %v936 = vrot.slane %v935, 2
      %v937 = vsel %vm366, %v935, %v936
      %v939 = vadd.f32 %v929, %v937
      %v941 = vlaneseq
      %v942 = vshrl.u32 %v941, 7
      %v943 = vsub.s32 0, %v942
      %v944 = vrot.slane %v297, %v943
      %v945 = vlaneseq
      %v946 = vshrl.u32 %v945, 7
      %v947 = vsub.s32 1, %v946
      %v948 = vrot.slane %v297, %v947
      %v949 = vcombine.low %v944, %v948
      %v951 = vunpack.c.l.s4 1983009808
      %v952 = vunpack.c.0.s8 %v951
      %v953 = vlaneseq
      %v954 = vshrl.u32 %v953, 7
      %v955 = vsub.s32 %v952, %v954
      %v956 = vrot.slane %v949, %v955
      %957 = vrot.lane.b32.xlu0 %v956, 6
      %v958 = vpop.permute.xlu0 %957
      %v959 = vrot.slane %v958, 6
      %vm960 = vcmask 48128
      %v961 = vsel %vm960, %v959, %v958
      %v963 = vmul.f32 %v939, %v961
      %965 = vrot.lane.b32.xlu0 %v963, 122
      %v966 = vpop.permute.xlu0 %965
      %v967 = vrot.slane %v966, 2
      %vm968 = vcmask 998400
      %v969 = vsel %vm968, %v966, %v967
      %v971 = vadd.f32 %v874, %v969
      %s972 = sld [smem:[#allocation6 + $0x31]]
      %v973 = vld [vmem:[#allocation5] sm:$0xf]
      %v974 = vstv %s972
      %v975 = vmul.f32 %v974, %v973
      %v976 = vadd.f32 %v975, 0.0
      %s977 = sld [smem:[#allocation6 + $0x38]]
      %v978 = vld [vmem:[#allocation5] sm:$0x3f]
      %v979 = vstv %s977
      %v980 = vmul.f32 %v979, %v978
      %982 = vrot.lane.b32.xlu0 %v980, 112
      %v983 = vpop.permute.xlu0 %982
      %v984 = vrot.slane %v983, 2
      %v985 = vsel %vm311, %v983, %v984
      %v987 = vadd.f32 %v976, %v985
      %s988 = sld [smem:[#allocation6 + $0x3f]]
      %v989 = vstv %s988
      %v990 = vmul.f32 %v989, %v978
      %992 = vrot.lane.b32.xlu0 %v990, 96
      %v993 = vpop.permute.xlu0 %992
      %v994 = vrot.slane %v993, 2
      %v995 = vsel %vm322, %v993, %v994
      %v997 = vadd.f32 %v987, %v995
      %s998 = sld [smem:[#allocation6 + $0x46]]
      %v999 = vstv %s998
      %v1000 = vmul.f32 %v999, %v978
      %1002 = vrot.lane.b32.xlu0 %v1000, 80
      %v1003 = vpop.permute.xlu0 %1002
      %v1004 = vrot.slane %v1003, 2
      %v1005 = vsel %vm333, %v1003, %v1004
      %v1007 = vadd.f32 %v997, %v1005
      %s1008 = sld [smem:[#allocation6 + $0x4d]]
      %v1009 = vstv %s1008
      %v1010 = vmul.f32 %v1009, %v978
      %1012 = vrot.lane.b32.xlu0 %v1010, 64
      %v1013 = vpop.permute.xlu0 %1012
      %v1014 = vrot.slane %v1013, 2
      %v1015 = vsel %vm344, %v1013, %v1014
      %v1017 = vadd.f32 %v1007, %v1015
      %s1018 = sld [smem:[#allocation6 + $0x54]]
      %v1019 = vstv %s1018
      %v1020 = vmul.f32 %v1019, %v978
      %1022 = vrot.lane.b32.xlu0 %v1020, 48
      %v1023 = vpop.permute.xlu0 %1022
      %v1024 = vrot.slane %v1023, 2
      %v1025 = vsel %vm355, %v1023, %v1024
      %v1027 = vadd.f32 %v1017, %v1025
      %s1028 = sld [smem:[#allocation6 + $0x5b]]
      %v1029 = vstv %s1028
      %v1030 = vmul.f32 %v1029, %v978
      %1032 = vrot.lane.b32.xlu0 %v1030, 32
      %v1033 = vpop.permute.xlu0 %1032
      %v1034 = vrot.slane %v1033, 2
      %v1035 = vsel %vm366, %v1033, %v1034
      %v1037 = vadd.f32 %v1027, %v1035
      %v1038 = vmul.f32 %v1037, %v386
      %v1039 = vadd.f32 %v971, %v1038
      %s1040 = sld [smem:[#allocation6 + $0x32]]
      %v1041 = vld [vmem:[#allocation5] sm:$0x3f]
      %v1042 = vstv %s1040
      %v1043 = vmul.f32 %v1042, %v1041
      %v1044 = vadd.f32 %v1043, 0.0
      %s1045 = sld [smem:[#allocation6 + $0x39]]
      %v1046 = vstv %s1045
      %v1047 = vmul.f32 %v1046, %v1041
      %1049 = vrot.lane.b32.xlu0 %v1047, 112
      %v1050 = vpop.permute.xlu0 %1049
      %v1051 = vrot.slane %v1050, 2
      %v1052 = vsel %vm311, %v1050, %v1051
      %v1054 = vadd.f32 %v1044, %v1052
      %s1055 = sld [smem:[#allocation6 + $0x40]]
      %v1056 = vstv %s1055
      %v1057 = vmul.f32 %v1056, %v1041
      %1059 = vrot.lane.b32.xlu0 %v1057, 96
      %v1060 = vpop.permute.xlu0 %1059
      %v1061 = vrot.slane %v1060, 2
      %v1062 = vsel %vm322, %v1060, %v1061
      %v1064 = vadd.f32 %v1054, %v1062
      %s1065 = sld [smem:[#allocation6 + $0x47]]
      %v1066 = vstv %s1065
      %v1067 = vmul.f32 %v1066, %v1041
      %1069 = vrot.lane.b32.xlu0 %v1067, 80
      %v1070 = vpop.permute.xlu0 %1069
      %v1071 = vrot.slane %v1070, 2
      %v1072 = vsel %vm333, %v1070, %v1071
      %v1074 = vadd.f32 %v1064, %v1072
      %s1075 = sld [smem:[#allocation6 + $0x4e]]
      %v1076 = vstv %s1075
      %v1077 = vmul.f32 %v1076, %v1041
      %1079 = vrot.lane.b32.xlu0 %v1077, 64
      %v1080 = vpop.permute.xlu0 %1079
      %v1081 = vrot.slane %v1080, 2
      %v1082 = vsel %vm344, %v1080, %v1081
      %v1084 = vadd.f32 %v1074, %v1082
      %s1085 = sld [smem:[#allocation6 + $0x55]]
      %v1086 = vstv %s1085
      %v1087 = vmul.f32 %v1086, %v1041
      %1089 = vrot.lane.b32.xlu0 %v1087, 48
      %v1090 = vpop.permute.xlu0 %1089
      %v1091 = vrot.slane %v1090, 2
      %v1092 = vsel %vm355, %v1090, %v1091
      %v1094 = vadd.f32 %v1084, %v1092
      %s1095 = sld [smem:[#allocation6 + $0x5c]]
      %v1096 = vstv %s1095
      %v1097 = vmul.f32 %v1096, %v1041
      %1099 = vrot.lane.b32.xlu0 %v1097, 32
      %v1100 = vpop.permute.xlu0 %1099
      %v1101 = vrot.slane %v1100, 2
      %v1102 = vsel %vm366, %v1100, %v1101
      %v1104 = vadd.f32 %v1094, %v1102
      %v1105 = vmul.f32 %v1104, %v476
      %1107 = vrot.lane.b32.xlu0 %v1105, 127
      %v1108 = vpop.permute.xlu0 %1107
      %v1109 = vrot.slane %v1108, 2
      %v1110 = vsel %vm483, %v1108, %v1109
      %v1112 = vadd.f32 %v1039, %v1110
      %s1113 = sld [smem:[#allocation6 + $0x33]]
      %v1114 = vld [vmem:[#allocation5] sm:$0x3f]
      %v1115 = vstv %s1113
      %v1116 = vmul.f32 %v1115, %v1114
      %v1117 = vadd.f32 %v1116, 0.0
      %s1118 = sld [smem:[#allocation6 + $0x3a]]
      %v1119 = vstv %s1118
      %v1120 = vmul.f32 %v1119, %v1114
      %1122 = vrot.lane.b32.xlu0 %v1120, 112
      %v1123 = vpop.permute.xlu0 %1122
      %v1124 = vrot.slane %v1123, 2
      %v1125 = vsel %vm311, %v1123, %v1124
      %v1127 = vadd.f32 %v1117, %v1125
      %s1128 = sld [smem:[#allocation6 + $0x41]]
      %v1129 = vstv %s1128
      %v1130 = vmul.f32 %v1129, %v1114
      %1132 = vrot.lane.b32.xlu0 %v1130, 96
      %v1133 = vpop.permute.xlu0 %1132
      %v1134 = vrot.slane %v1133, 2
      %v1135 = vsel %vm322, %v1133, %v1134
      %v1137 = vadd.f32 %v1127, %v1135
      %s1138 = sld [smem:[#allocation6 + $0x48]]
      %v1139 = vstv %s1138
      %v1140 = vmul.f32 %v1139, %v1114
      %1142 = vrot.lane.b32.xlu0 %v1140, 80
      %v1143 = vpop.permute.xlu0 %1142
      %v1144 = vrot.slane %v1143, 2
      %v1145 = vsel %vm333, %v1143, %v1144
      %v1147 = vadd.f32 %v1137, %v1145
      %s1148 = sld [smem:[#allocation6 + $0x4f]]
      %v1149 = vstv %s1148
      %v1150 = vmul.f32 %v1149, %v1114
      %1152 = vrot.lane.b32.xlu0 %v1150, 64
      %v1153 = vpop.permute.xlu0 %1152
      %v1154 = vrot.slane %v1153, 2
      %v1155 = vsel %vm344, %v1153, %v1154
      %v1157 = vadd.f32 %v1147, %v1155
      %s1158 = sld [smem:[#allocation6 + $0x56]]
      %v1159 = vstv %s1158
      %v1160 = vmul.f32 %v1159, %v1114
      %1162 = vrot.lane.b32.xlu0 %v1160, 48
      %v1163 = vpop.permute.xlu0 %1162
      %v1164 = vrot.slane %v1163, 2
      %v1165 = vsel %vm355, %v1163, %v1164
      %v1167 = vadd.f32 %v1157, %v1165
      %s1168 = sld [smem:[#allocation6 + $0x5d]]
      %v1169 = vstv %s1168
      %v1170 = vmul.f32 %v1169, %v1114
      %1172 = vrot.lane.b32.xlu0 %v1170, 32
      %v1173 = vpop.permute.xlu0 %1172
      %v1174 = vrot.slane %v1173, 2
      %v1175 = vsel %vm366, %v1173, %v1174
      %v1177 = vadd.f32 %v1167, %v1175
      %v1178 = vmul.f32 %v1177, %v573
      %1180 = vrot.lane.b32.xlu0 %v1178, 126
      %v1181 = vpop.permute.xlu0 %1180
      %v1182 = vrot.slane %v1181, 2
      %v1183 = vsel %vm580, %v1181, %v1182
      %v1185 = vadd.f32 %v1112, %v1183
      %s1186 = sld [smem:[#allocation6 + $0x34]]
      %v1187 = vld [vmem:[#allocation5] sm:$0x3f]
      %v1188 = vstv %s1186
      %v1189 = vmul.f32 %v1188, %v1187
      %v1190 = vadd.f32 %v1189, 0.0
      %s1191 = sld [smem:[#allocation6 + $0x3b]]
      %v1192 = vstv %s1191
      %v1193 = vmul.f32 %v1192, %v1187
      %1195 = vrot.lane.b32.xlu0 %v1193, 112
      %v1196 = vpop.permute.xlu0 %1195
      %v1197 = vrot.slane %v1196, 2
      %v1198 = vsel %vm311, %v1196, %v1197
      %v1200 = vadd.f32 %v1190, %v1198
      %s1201 = sld [smem:[#allocation6 + $0x42]]
      %v1202 = vstv %s1201
      %v1203 = vmul.f32 %v1202, %v1187
      %1205 = vrot.lane.b32.xlu0 %v1203, 96
      %v1206 = vpop.permute.xlu0 %1205
      %v1207 = vrot.slane %v1206, 2
      %v1208 = vsel %vm322, %v1206, %v1207
      %v1210 = vadd.f32 %v1200, %v1208
      %s1211 = sld [smem:[#allocation6 + $0x49]]
      %v1212 = vstv %s1211
      %v1213 = vmul.f32 %v1212, %v1187
      %1215 = vrot.lane.b32.xlu0 %v1213, 80
      %v1216 = vpop.permute.xlu0 %1215
      %v1217 = vrot.slane %v1216, 2
      %v1218 = vsel %vm333, %v1216, %v1217
      %v1220 = vadd.f32 %v1210, %v1218
      %s1221 = sld [smem:[#allocation6 + $0x50]]
      %v1222 = vstv %s1221
      %v1223 = vmul.f32 %v1222, %v1187
      %1225 = vrot.lane.b32.xlu0 %v1223, 64
      %v1226 = vpop.permute.xlu0 %1225
      %v1227 = vrot.slane %v1226, 2
      %v1228 = vsel %vm344, %v1226, %v1227
      %v1230 = vadd.f32 %v1220, %v1228
      %s1231 = sld [smem:[#allocation6 + $0x57]]
      %v1232 = vstv %s1231
      %v1233 = vmul.f32 %v1232, %v1187
      %1235 = vrot.lane.b32.xlu0 %v1233, 48
      %v1236 = vpop.permute.xlu0 %1235
      %v1237 = vrot.slane %v1236, 2
      %v1238 = vsel %vm355, %v1236, %v1237
      %v1240 = vadd.f32 %v1230, %v1238
      %s1241 = sld [smem:[#allocation6 + $0x5e]]
      %v1242 = vstv %s1241
      %v1243 = vmul.f32 %v1242, %v1187
      %1245 = vrot.lane.b32.xlu0 %v1243, 32
      %v1246 = vpop.permute.xlu0 %1245
      %v1247 = vrot.slane %v1246, 2
      %v1248 = vsel %vm366, %v1246, %v1247
      %v1250 = vadd.f32 %v1240, %v1248
      %v1251 = vmul.f32 %v1250, %v670
      %1253 = vrot.lane.b32.xlu0 %v1251, 125
      %v1254 = vpop.permute.xlu0 %1253
      %v1255 = vrot.slane %v1254, 2
      %v1256 = vsel %vm677, %v1254, %v1255
      %v1258 = vadd.f32 %v1185, %v1256
      %s1259 = sld [smem:[#allocation6 + $0x35]]
      %v1260 = vld [vmem:[#allocation5] sm:$0x3f]
      %v1261 = vstv %s1259
      %v1262 = vmul.f32 %v1261, %v1260
      %v1263 = vadd.f32 %v1262, 0.0
      %s1264 = sld [smem:[#allocation6 + $0x3c]]
      %v1265 = vstv %s1264
      %v1266 = vmul.f32 %v1265, %v1260
      %1268 = vrot.lane.b32.xlu0 %v1266, 112
      %v1269 = vpop.permute.xlu0 %1268
      %v1270 = vrot.slane %v1269, 2
      %v1271 = vsel %vm311, %v1269, %v1270
      %v1273 = vadd.f32 %v1263, %v1271
      %s1274 = sld [smem:[#allocation6 + $0x43]]
      %v1275 = vstv %s1274
      %v1276 = vmul.f32 %v1275, %v1260
      %1278 = vrot.lane.b32.xlu0 %v1276, 96
      %v1279 = vpop.permute.xlu0 %1278
      %v1280 = vrot.slane %v1279, 2
      %v1281 = vsel %vm322, %v1279, %v1280
      %v1283 = vadd.f32 %v1273, %v1281
      %s1284 = sld [smem:[#allocation6 + $0x4a]]
      %v1285 = vstv %s1284
      %v1286 = vmul.f32 %v1285, %v1260
      %1288 = vrot.lane.b32.xlu0 %v1286, 80
      %v1289 = vpop.permute.xlu0 %1288
      %v1290 = vrot.slane %v1289, 2
      %v1291 = vsel %vm333, %v1289, %v1290
      %v1293 = vadd.f32 %v1283, %v1291
      %s1294 = sld [smem:[#allocation6 + $0x51]]
      %v1295 = vstv %s1294
      %v1296 = vmul.f32 %v1295, %v1260
      %1298 = vrot.lane.b32.xlu0 %v1296, 64
      %v1299 = vpop.permute.xlu0 %1298
      %v1300 = vrot.slane %v1299, 2
      %v1301 = vsel %vm344, %v1299, %v1300
      %v1303 = vadd.f32 %v1293, %v1301
      %s1304 = sld [smem:[#allocation6 + $0x58]]
      %v1305 = vstv %s1304
      %v1306 = vmul.f32 %v1305, %v1260
      %1308 = vrot.lane.b32.xlu0 %v1306, 48
      %v1309 = vpop.permute.xlu0 %1308
      %v1310 = vrot.slane %v1309, 2
      %v1311 = vsel %vm355, %v1309, %v1310
      %v1313 = vadd.f32 %v1303, %v1311
      %s1314 = sld [smem:[#allocation6 + $0x5f]]
      %v1315 = vstv %s1314
      %v1316 = vmul.f32 %v1315, %v1260
      %1318 = vrot.lane.b32.xlu0 %v1316, 32
      %v1319 = vpop.permute.xlu0 %1318
      %v1320 = vrot.slane %v1319, 2
      %v1321 = vsel %vm366, %v1319, %v1320
      %v1323 = vadd.f32 %v1313, %v1321
      %v1324 = vmul.f32 %v1323, %v767
      %1326 = vrot.lane.b32.xlu0 %v1324, 124
      %v1327 = vpop.permute.xlu0 %1326
      %v1328 = vrot.slane %v1327, 2
      %v1329 = vsel %vm774, %v1327, %v1328
      %v1331 = vadd.f32 %v1258, %v1329
      %s1332 = sld [smem:[#allocation6 + $0x36]]
      %v1333 = vld [vmem:[#allocation5] sm:$0x3f]
      %v1334 = vstv %s1332
      %v1335 = vmul.f32 %v1334, %v1333
      %v1336 = vadd.f32 %v1335, 0.0
      %s1337 = sld [smem:[#allocation6 + $0x3d]]
      %v1338 = vstv %s1337
      %v1339 = vmul.f32 %v1338, %v1333
      %1341 = vrot.lane.b32.xlu0 %v1339, 112
      %v1342 = vpop.permute.xlu0 %1341
      %v1343 = vrot.slane %v1342, 2
      %v1344 = vsel %vm311, %v1342, %v1343
      %v1346 = vadd.f32 %v1336, %v1344
      %s1347 = sld [smem:[#allocation6 + $0x44]]
      %v1348 = vstv %s1347
      %v1349 = vmul.f32 %v1348, %v1333
      %1351 = vrot.lane.b32.xlu0 %v1349, 96
      %v1352 = vpop.permute.xlu0 %1351
      %v1353 = vrot.slane %v1352, 2
      %v1354 = vsel %vm322, %v1352, %v1353
      %v1356 = vadd.f32 %v1346, %v1354
      %s1357 = sld [smem:[#allocation6 + $0x4b]]
      %v1358 = vstv %s1357
      %v1359 = vmul.f32 %v1358, %v1333
      %1361 = vrot.lane.b32.xlu0 %v1359, 80
      %v1362 = vpop.permute.xlu0 %1361
      %v1363 = vrot.slane %v1362, 2
      %v1364 = vsel %vm333, %v1362, %v1363
      %v1366 = vadd.f32 %v1356, %v1364
      %s1367 = sld [smem:[#allocation6 + $0x52]]
      %v1368 = vstv %s1367
      %v1369 = vmul.f32 %v1368, %v1333
      %1371 = vrot.lane.b32.xlu0 %v1369, 64
      %v1372 = vpop.permute.xlu0 %1371
      %v1373 = vrot.slane %v1372, 2
      %v1374 = vsel %vm344, %v1372, %v1373
      %v1376 = vadd.f32 %v1366, %v1374
      %s1377 = sld [smem:[#allocation6 + $0x59]]
      %v1378 = vstv %s1377
      %v1379 = vmul.f32 %v1378, %v1333
      %1381 = vrot.lane.b32.xlu0 %v1379, 48
      %v1382 = vpop.permute.xlu0 %1381
      %v1383 = vrot.slane %v1382, 2
      %v1384 = vsel %vm355, %v1382, %v1383
      %v1386 = vadd.f32 %v1376, %v1384
      %s1387 = sld [smem:[#allocation6 + $0x60]]
      %v1388 = vstv %s1387
      %v1389 = vmul.f32 %v1388, %v1333
      %1391 = vrot.lane.b32.xlu0 %v1389, 32
      %v1392 = vpop.permute.xlu0 %1391
      %v1393 = vrot.slane %v1392, 2
      %v1394 = vsel %vm366, %v1392, %v1393
      %v1396 = vadd.f32 %v1386, %v1394
      %v1397 = vmul.f32 %v1396, %v864
      %1399 = vrot.lane.b32.xlu0 %v1397, 123
      %v1400 = vpop.permute.xlu0 %1399
      %v1401 = vrot.slane %v1400, 2
      %v1402 = vsel %vm871, %v1400, %v1401
      %v1404 = vadd.f32 %v1331, %v1402
      %s1405 = sld [smem:[#allocation6 + $0x37]]
      %v1406 = vld [vmem:[#allocation5] sm:$0x3f]
      %v1407 = vstv %s1405
      %v1408 = vmul.f32 %v1407, %v1406
      %v1409 = vadd.f32 %v1408, 0.0
      %s1410 = sld [smem:[#allocation6 + $0x3e]]
      %v1411 = vstv %s1410
      %v1412 = vmul.f32 %v1411, %v1406
      %1414 = vrot.lane.b32.xlu0 %v1412, 112
      %v1415 = vpop.permute.xlu0 %1414
      %v1416 = vrot.slane %v1415, 2
      %v1417 = vsel %vm311, %v1415, %v1416
      %v1419 = vadd.f32 %v1409, %v1417
      %s1420 = sld [smem:[#allocation6 + $0x45]]
      %v1421 = vstv %s1420
      %v1422 = vmul.f32 %v1421, %v1406
      %1424 = vrot.lane.b32.xlu0 %v1422, 96
      %v1425 = vpop.permute.xlu0 %1424
      %v1426 = vrot.slane %v1425, 2
      %v1427 = vsel %vm322, %v1425, %v1426
      %v1429 = vadd.f32 %v1419, %v1427
      %s1430 = sld [smem:[#allocation6 + $0x4c]]
      %v1431 = vstv %s1430
      %v1432 = vmul.f32 %v1431, %v1406
      %1434 = vrot.lane.b32.xlu0 %v1432, 80
      %v1435 = vpop.permute.xlu0 %1434
      %v1436 = vrot.slane %v1435, 2
      %v1437 = vsel %vm333, %v1435, %v1436
      %v1439 = vadd.f32 %v1429, %v1437
      %s1440 = sld [smem:[#allocation6 + $0x53]]
      %v1441 = vstv %s1440
      %v1442 = vmul.f32 %v1441, %v1406
      %1444 = vrot.lane.b32.xlu0 %v1442, 64
      %v1445 = vpop.permute.xlu0 %1444
      %v1446 = vrot.slane %v1445, 2
      %v1447 = vsel %vm344, %v1445, %v1446
      %v1449 = vadd.f32 %v1439, %v1447
      %s1450 = sld [smem:[#allocation6 + $0x5a]]
      %v1451 = vstv %s1450
      %v1452 = vmul.f32 %v1451, %v1406
      %1454 = vrot.lane.b32.xlu0 %v1452, 48
      %v1455 = vpop.permute.xlu0 %1454
      %v1456 = vrot.slane %v1455, 2
      %v1457 = vsel %vm355, %v1455, %v1456
      %v1459 = vadd.f32 %v1449, %v1457
      %s1460 = sld [smem:[#allocation6 + $0x61]]
      %v1461 = vstv %s1460
      %v1462 = vmul.f32 %v1461, %v1406
      %1464 = vrot.lane.b32.xlu0 %v1462, 32
      %v1465 = vpop.permute.xlu0 %1464
      %v1466 = vrot.slane %v1465, 2
      %v1467 = vsel %vm366, %v1465, %v1466
      %v1469 = vadd.f32 %v1459, %v1467
      %v1470 = vmul.f32 %v1469, %v961
      %1472 = vrot.lane.b32.xlu0 %v1470, 122
      %v1473 = vpop.permute.xlu0 %1472
      %v1474 = vrot.slane %v1473, 2
      %v1475 = vsel %vm968, %v1473, %v1474
      %v1477 = vadd.f32 %v1404, %v1475
      %v1478 = vxor.u32 %v1477, 2147483648
      %v1479 = vmul.f32 %v1478, 1.442695
      %v1480 = vpow.pop %v1479
      %v1481 = vadd.f32 %v1480, 1.0
      %v1482 = vrcp.pop %v1481
      %v1483 = vmul.f32 1.0, %v1482
      %1484 = vst [vmem:[#allocation13] sm:$0xf] %v1483
    $region37: #{tpu_custom_call.1} parent=1 // pred_fallthru
      _
    // Predicated region
    $region38: #{tpu_custom_call.1} parent=1 // pred_check
      _
    $region39: #{tpu_custom_call.1} parent=1 // pred_check_branch
      %1486 = sbr.rel (0) target = $region41
    $region40: #{tpu_custom_call.1} parent=1 // pred_region
      %s1488 = ssub.s32 64, 64
      %1489 = vsyncadd [#allocation8], %s1488
      %s1491 = sshll.u32 [#allocation13], 4
      %s1492 = int_to_ptr.vmem [resolvable:$true] %s1491
      %1494 = dma.vmem_to_hbm [thread:$0]  %s1492, 64, %s3, [#allocation8]
    $region41: #{tpu_custom_call.1} parent=1 // pred_fallthru
      _
    // Predicated region
    $region42: #{tpu_custom_call.1} parent=1 // pred_check
      _
    $region43: #{tpu_custom_call.1} parent=1 // pred_check_branch
      %1496 = sbr.rel (0) target = $region45
    $region44: #{tpu_custom_call.1} parent=1 // pred_region
      %1497 = dma.done [#allocation8], 64
    $region45: #{tpu_custom_call.1} parent=1 // pred_fallthru
      _
    %1498 = vsyncpa [#allocation7], 1
    %1499 = vsyncpa [#allocation12], 1
    %1500 = vsyncpa [#allocation8], 1
    %1501 = vsyncpa [#allocation9], 1

</llo_original>
